<compile_context>
chip_gen: v5e
topology: v5e:2x2
jax: 0.10.0
libtpu: 0.0.40
codegen_flags: <defaults>
</compile_context>

<pallas_src>
import functools

import jax
import jax.numpy as jnp
from jax import lax
from jax.experimental import pallas as pl
from jax.experimental.pallas import tpu as pltpu

NEG_BIG = -1e30


def _full_spec(shape):
    r = len(shape)
    return pl.BlockSpec(tuple(shape), lambda i, _r=r: (0,) * _r)


# --------------------------------------------------------------------------
# Single fused kernel: 3x GATConv(+relu) -> node_proj(+relu) -> fc_out
# --------------------------------------------------------------------------
def _fused_model_kernel(*refs, num_layers, heads, out_ch, num_nodes):
    """refs layout:
      [0] x [N, F]
      [1] e_h [H*N, H]  head-row selector (layer-invariant)
      per layer l (5 refs): W_l [in_l, H*C], arep_l [H*N, H*C], asrc_blk_l [H, H*C],
                            e2_l [H*N, N] (edge logits + additive -1e30 mask),
                            bias_l [1, H*C]
      then: node_proj_w [H*C, P], node_proj_b [1, P], fc_w [nn*P, O],
            nodemask [N, nn*P], gt [B, N], fc_b [1, O], o_ref [B, O] (output)
    """
    x_ref, eh_ref = refs[0], refs[1]
    base = 2 + 5 * num_layers
    npw_ref, npb_ref, fcw_ref, nmask_ref, gt_ref, fcb_ref, o_ref = refs[base:base + 7]

    nt_last = (((1,), (1,)), ((), ()))  # contract last dims (A @ B.T)
    C = out_ch

    e_h = eh_ref[...]                    # [H*N, H]
    h = x_ref[...]                       # [N, F]
    for l in range(num_layers):
        w_ref, arep_ref, asrc_ref, e2_ref, b_ref = refs[2 + 5 * l:2 + 5 * (l + 1)]
        xp = jnp.dot(h, w_ref[...], preferred_element_type=jnp.float32)      # [N, HC]
        n = xp.shape[0]

        # dst term: per-(head, dst) scalar via one lane-reduce on sublane-tiled xp
        xtile = jnp.concatenate([xp] * heads, axis=0)                        # [H*N, HC]
        sd_col = jnp.sum(xtile * arep_ref[...], axis=-1, keepdims=True)      # [H*N, 1]
        # src term: [H, N] then head-row broadcast (one matmul) -> [H*N, N]
        ss_t = lax.dot_general(asrc_ref[...], xp, nt_last,
                               preferred_element_type=jnp.float32)           # [H, N]
        ss_part = jnp.dot(e_h, ss_t, preferred_element_type=jnp.float32)     # [H*N, N]

        # batched (all heads at once) masked logits + softmax over src
        logits = sd_col + ss_part + e2_ref[...]                              # [H*N, N]
        logits = jnp.maximum(logits, 0.2 * logits)                           # LeakyReLU(0.2)
        m = jnp.max(logits, axis=-1, keepdims=True)
        p = jnp.exp(logits - m)                                              # masked -> exact 0
        inv = pl.reciprocal(jnp.sum(p, axis=-1, keepdims=True), approx=True)
        alpha = p * inv                                                      # [H*N, N]

        # per-head aggregation kept in vregs -> one lane-dense [N, HC] per layer
        outs = [jnp.dot(alpha[hd * n:(hd + 1) * n, :],
                        xp[:, hd * C:(hd + 1) * C],
                        preferred_element_type=jnp.float32)
                for hd in range(heads)]
        h = jnp.maximum(jnp.concatenate(outs, axis=-1) + b_ref[...], 0.0)    # relu(GATConv)

    # node_proj + relu  ->  [N, P]
    hp = jnp.maximum(
        jnp.dot(h, npw_ref[...], preferred_element_type=jnp.float32) + npb_ref[...], 0.0)

    # fc_out on per-graph row-major flattened node projections, as two matmuls:
    #   hp_wide[i, n*P+p] = hp[i, p] * (i mod nn == n)
    #   t[i, o]   = sum_{n,p} hp_wide[i, n*P+p] * fc_w[n*P+p, o]
    #   out[b, o] = sum_{i in graph b} t[i, o] + fc_b[o]
    hp_wide = jnp.concatenate([hp] * num_nodes, axis=1) * nmask_ref[...]     # [N, nn*P]
    t = jnp.dot(hp_wide, fcw_ref[...], preferred_element_type=jnp.float32)   # [N, O]
    o_ref[...] = jnp.dot(gt_ref[...], t, preferred_element_type=jnp.float32) + fcb_ref[...]


# --------------------------------------------------------------------------
# Glue: graph densification (plain JAX — dynamic scatter, no clean Pallas path)
# --------------------------------------------------------------------------
def build_dense_graph(edge_index, edge_attr, n_total):
    src, dst = edge_index[0], edge_index[1]
    de = edge_attr.shape[1]
    # PyG add_self_loops(fill_value='mean'): self-loop attr = mean of incoming edge attrs
    deg = jnp.zeros((n_total,), jnp.float32).at[dst].add(1.0)
    sums = jnp.zeros((n_total, de), jnp.float32).at[dst].add(edge_attr)
    loop_attr = sums / jnp.maximum(deg, 1.0)[:, None]
    idx = jnp.arange(n_total)
    mask = jnp.zeros((n_total, n_total), jnp.float32).at[dst, src].set(1.0)
    mask = mask.at[idx, idx].set(1.0)
    dense_e = jnp.zeros((n_total, n_total, de), jnp.float32).at[dst, src].set(edge_attr)
    dense_e = dense_e.at[idx, idx].set(loop_attr)
    return mask, dense_e


# --------------------------------------------------------------------------
# Full model forward (jitted; config dims static)
# --------------------------------------------------------------------------
@functools.partial(jax.jit, static_argnames=("num_nodes", "proj_nodes", "heads",
                                             "gat_dim", "batch_size"))
def model_forward(params, x, edge_index, edge_attr, *, num_nodes, proj_nodes,
                  heads, gat_dim, batch_size):
    n_total = x.shape[0]
    C = gat_dim
    HC = heads * C
    f32 = jnp.float32

    mask, dense_e = build_dense_graph(edge_index, edge_attr, n_total)
    mask_bias = (1.0 - mask) * jnp.float32(NEG_BIG)          # additive mask [N, N]
    eye_h = jnp.eye(heads, dtype=f32)

    num_layers = len(params["gat_layers"])
    # e_h[h*N + i, h'] = 1 iff h == h'  (broadcasts per-head src logits to head-row blocks)
    e_h = jnp.repeat(eye_h, n_total, axis=0)                  # [H*N, H]

    kernel_inputs = [x.astype(f32), e_h]
    for (W, att_src, att_dst, att_edge, W_e, bias) in params["gat_layers"]:
        de = W_e.shape[0]
        # Fold lin_edge with att_edge: M_e[d, h] = sum_c W_e[d, h*C + c] * att_edge[h, c]
        M_e = jnp.einsum("dhc,hc->dh", W_e.reshape(de, heads, C), att_edge)
        # e2[h*N + dst, src] = att_edge_h . lin_edge(e_{src->dst}) ; -1e30 where no edge
        e_al = jnp.einsum("ijd,dh->hij", dense_e, M_e) + mask_bias[None]
        e2 = e_al.reshape(heads * n_total, n_total).astype(f32)
        # Block-structured attention matrices: row h holds att_*[h] in cols h*C:(h+1)*C.
        adst_blk = (att_dst[:, None, :] * eye_h[:, :, None]).reshape(heads, HC)
        asrc_blk = (att_src[:, None, :] * eye_h[:, :, None]).reshape(heads, HC)
        arep = jnp.repeat(adst_blk, n_total, axis=0).astype(f32)     # [H*N, HC]
        kernel_inputs += [W.astype(f32), arep, asrc_blk.astype(f32), e2,
                          bias.reshape(1, HC).astype(f32)]

    P = proj_nodes
    O = params["fc_w"].shape[1]
    # nodemask[i, n*P + p] = 1 iff (i mod num_nodes) == n  (row-major flatten selector)
    node_of = jnp.arange(n_total) % num_nodes
    col_node = jnp.arange(num_nodes * P) // P
    nodemask = (node_of[:, None] == col_node[None, :]).astype(f32)   # [N, nn*P]
    # gt[b, i] = 1 iff node i belongs to graph b (nodes are graph-contiguous)
    gt = jnp.repeat(jnp.eye(batch_size, dtype=f32), num_nodes, axis=1)
    kernel_inputs += [params["node_proj_w"].astype(f32),
                      params["node_proj_b"].reshape(1, P).astype(f32),
                      params["fc_w"].astype(f32), nodemask, gt,
                      params["fc_b"].reshape(1, O).astype(f32)]

    kernel = functools.partial(_fused_model_kernel, num_layers=num_layers,
                               heads=heads, out_ch=C, num_nodes=num_nodes)
    return pl.pallas_call(
        kernel,
        out_shape=jax.ShapeDtypeStruct((batch_size, O), jnp.float32),
        grid=(1,),
        in_specs=[_full_spec(a.shape) for a in kernel_inputs],
        out_specs=_full_spec((batch_size, O)),
        compiler_params=pltpu.CompilerParams(dimension_semantics=("arbitrary",)),
    )(*kernel_inputs)


# --------------------------------------------------------------------------
# Deterministic parameter init
# --------------------------------------------------------------------------
def init_gat_params(key, in_dim, out_ch, heads, edge_dim):
    ks = jax.random.split(key, 5)
    HC = heads * out_ch
    W = jax.random.normal(ks[0], (in_dim, HC), jnp.float32) / jnp.sqrt(float(in_dim))
    att_src = 0.1 * jax.random.normal(ks[1], (heads, out_ch), jnp.float32)
    att_dst = 0.1 * jax.random.normal(ks[2], (heads, out_ch), jnp.float32)
    att_edge = 0.1 * jax.random.normal(ks[3], (heads, out_ch), jnp.float32)
    W_e = jax.random.normal(ks[4], (edge_dim, HC), jnp.float32) / jnp.sqrt(float(edge_dim))
    bias = jnp.zeros((HC,), jnp.float32)  # PyG inits GATConv bias to zeros
    return (W, att_src, att_dst, att_edge, W_e, bias)


if __name__ == "__main__":
    # Model hyperparams (small, consistent with the module)
    num_nodes = 8          # nodes per graph
    batch_sz = 2
    num_features = 8
    edge_attr_dim = 4
    GAT_dim = 16
    heads = 4
    gat_layers = 3
    proj_nodes = 4
    output_dim = 8
    n_total = num_nodes * batch_sz

    key = jax.random.PRNGKey(0)
    k_x, k_e, k_p = jax.random.split(key, 3)

    # Node features
    x = jax.random.normal(k_x, (n_total, num_features), jnp.float32)

    # Bidirectional ring graph per sample
    srcs, dsts = [], []
    for b in range(batch_sz):
        off = b * num_nodes
        for i in range(num_nodes):
            j = (i + 1) % num_nodes
            srcs += [off + i, off + j]
            dsts += [off + j, off + i]
    edge_index = jnp.array([srcs, dsts], dtype=jnp.int32)   # [2, E]
    num_edges = edge_index.shape[1]
    edge_attr = jax.random.normal(k_e, (num_edges, edge_attr_dim), jnp.float32)
    batch = jnp.repeat(jnp.arange(batch_sz, dtype=jnp.int32), num_nodes)

    # Parameters
    keys = jax.random.split(k_p, gat_layers + 2)
    gat_params = []
    in_dim = num_features
    for layer in range(gat_layers):
        gat_params.append(init_gat_params(keys[layer], in_dim, GAT_dim, heads, edge_attr_dim))
        in_dim = GAT_dim * heads
    params = {
        "gat_layers": gat_params,
        "node_proj_w": jax.random.normal(keys[gat_layers], (GAT_dim * heads, proj_nodes),
                                         jnp.float32) / jnp.sqrt(float(GAT_dim * heads)),
        "node_proj_b": jnp.zeros((proj_nodes,), jnp.float32),
        "fc_w": jax.random.normal(keys[gat_layers + 1], (num_nodes * proj_nodes, output_dim),
                                  jnp.float32) / jnp.sqrt(float(num_nodes * proj_nodes)),
        "fc_b": jnp.zeros((output_dim,), jnp.float32),
    }

    # batch_size derived host-side (outside jit), passed as a static arg.
    batch_size = int(jax.device_get(batch).max()) + 1

    out = model_forward(params, x, edge_index, edge_attr,
                        num_nodes=num_nodes, proj_nodes=proj_nodes, heads=heads,
                        gat_dim=GAT_dim, batch_size=batch_size)
    jax.block_until_ready(out)
    assert out.shape == (batch_size, output_dim)
    print("KERNEL_OK")
</pallas_src>

<mosaic_0001>
module attributes {stable_mosaic.version = 11 : i64} {
  func.func @_fused_model_kernel(%arg0: i32, %arg1: memref<16x8xf32, #tpu.memory_space<vmem>>, %arg2: memref<64x4xf32, #tpu.memory_space<vmem>>, %arg3: memref<8x64xf32, #tpu.memory_space<vmem>>, %arg4: memref<64x64xf32, #tpu.memory_space<vmem>>, %arg5: memref<4x64xf32, #tpu.memory_space<vmem>>, %arg6: memref<64x16xf32, #tpu.memory_space<vmem>>, %arg7: memref<1x64xf32, #tpu.memory_space<vmem>>, %arg8: memref<64x64xf32, #tpu.memory_space<vmem>>, %arg9: memref<64x64xf32, #tpu.memory_space<vmem>>, %arg10: memref<4x64xf32, #tpu.memory_space<vmem>>, %arg11: memref<64x16xf32, #tpu.memory_space<vmem>>, %arg12: memref<1x64xf32, #tpu.memory_space<vmem>>, %arg13: memref<64x64xf32, #tpu.memory_space<vmem>>, %arg14: memref<64x64xf32, #tpu.memory_space<vmem>>, %arg15: memref<4x64xf32, #tpu.memory_space<vmem>>, %arg16: memref<64x16xf32, #tpu.memory_space<vmem>>, %arg17: memref<1x64xf32, #tpu.memory_space<vmem>>, %arg18: memref<64x4xf32, #tpu.memory_space<vmem>>, %arg19: memref<1x4xf32, #tpu.memory_space<vmem>>, %arg20: memref<32x8xf32, #tpu.memory_space<vmem>>, %arg21: memref<16x32xf32, #tpu.memory_space<vmem>>, %arg22: memref<2x16xf32, #tpu.memory_space<vmem>>, %arg23: memref<1x8xf32, #tpu.memory_space<vmem>>, %arg24: memref<2x8xf32, #tpu.memory_space<vmem>>) attributes {dimension_semantics = [#tpu.dimension_semantics<arbitrary>], iteration_bounds = array<i64: 1>, scalar_prefetch = 0 : i64, scratch_operands = 0 : i64, tpu.core_type = #tpu.core_type<tc>, window_params = [{pipeline_mode = #tpu.pipeline_mode<synchronous>, transform_indices = @transform_0, window_bounds = array<i64: 16, 8>}, {pipeline_mode = #tpu.pipeline_mode<synchronous>, transform_indices = @transform_1, window_bounds = array<i64: 64, 4>}, {pipeline_mode = #tpu.pipeline_mode<synchronous>, transform_indices = @transform_2, window_bounds = array<i64: 8, 64>}, {pipeline_mode = #tpu.pipeline_mode<synchronous>, transform_indices = @transform_3, window_bounds = array<i64: 64, 64>}, {pipeline_mode = #tpu.pipeline_mode<synchronous>, transform_indices = @transform_4, window_bounds = array<i64: 4, 64>}, {pipeline_mode = #tpu.pipeline_mode<synchronous>, transform_indices = @transform_5, window_bounds = array<i64: 64, 16>}, {pipeline_mode = #tpu.pipeline_mode<synchronous>, transform_indices = @transform_6, window_bounds = array<i64: 1, 64>}, {pipeline_mode = #tpu.pipeline_mode<synchronous>, transform_indices = @transform_7, window_bounds = array<i64: 64, 64>}, {pipeline_mode = #tpu.pipeline_mode<synchronous>, transform_indices = @transform_8, window_bounds = array<i64: 64, 64>}, {pipeline_mode = #tpu.pipeline_mode<synchronous>, transform_indices = @transform_9, window_bounds = array<i64: 4, 64>}, {pipeline_mode = #tpu.pipeline_mode<synchronous>, transform_indices = @transform_10, window_bounds = array<i64: 64, 16>}, {pipeline_mode = #tpu.pipeline_mode<synchronous>, transform_indices = @transform_11, window_bounds = array<i64: 1, 64>}, {pipeline_mode = #tpu.pipeline_mode<synchronous>, transform_indices = @transform_12, window_bounds = array<i64: 64, 64>}, {pipeline_mode = #tpu.pipeline_mode<synchronous>, transform_indices = @transform_13, window_bounds = array<i64: 64, 64>}, {pipeline_mode = #tpu.pipeline_mode<synchronous>, transform_indices = @transform_14, window_bounds = array<i64: 4, 64>}, {pipeline_mode = #tpu.pipeline_mode<synchronous>, transform_indices = @transform_15, window_bounds = array<i64: 64, 16>}, {pipeline_mode = #tpu.pipeline_mode<synchronous>, transform_indices = @transform_16, window_bounds = array<i64: 1, 64>}, {pipeline_mode = #tpu.pipeline_mode<synchronous>, transform_indices = @transform_17, window_bounds = array<i64: 64, 4>}, {pipeline_mode = #tpu.pipeline_mode<synchronous>, transform_indices = @transform_18, window_bounds = array<i64: 1, 4>}, {pipeline_mode = #tpu.pipeline_mode<synchronous>, transform_indices = @transform_19, window_bounds = array<i64: 32, 8>}, {pipeline_mode = #tpu.pipeline_mode<synchronous>, transform_indices = @transform_20, window_bounds = array<i64: 16, 32>}, {pipeline_mode = #tpu.pipeline_mode<synchronous>, transform_indices = @transform_21, window_bounds = array<i64: 2, 16>}, {pipeline_mode = #tpu.pipeline_mode<synchronous>, transform_indices = @transform_22, window_bounds = array<i64: 1, 8>}, {pipeline_mode = #tpu.pipeline_mode<synchronous>, transform_indices = @transform_23, window_bounds = array<i64: 2, 8>}]} {
    %c0 = arith.constant 0 : index
    %c0_0 = arith.constant 0 : index
    %0 = vector.load %arg2[%c0, %c0_0] : memref<64x4xf32, #tpu.memory_space<vmem>>, vector<64x4xf32>
    %c0_1 = arith.constant 0 : index
    %c0_2 = arith.constant 0 : index
    %1 = vector.load %arg1[%c0_1, %c0_2] : memref<16x8xf32, #tpu.memory_space<vmem>>, vector<16x8xf32>
    %c0_3 = arith.constant 0 : index
    %c0_4 = arith.constant 0 : index
    %2 = vector.load %arg3[%c0_3, %c0_4] : memref<8x64xf32, #tpu.memory_space<vmem>>, vector<8x64xf32>
    %cst = arith.constant dense<0.000000e+00> : vector<16x64xf32>
    %3 = tpu.matmul %1, %2, %cst {dimension_numbers = #tpu.dot_dimension_numbers<[1], [0], [0], [1], [0, 0, 1, 1], [], []>} : vector<16x8xf32>, vector<8x64xf32>, vector<16x64xf32> -> vector<16x64xf32>
    %4 = tpu.concatenate %3, %3, %3, %3 in 0 : vector<16x64xf32>, vector<16x64xf32>, vector<16x64xf32>, vector<16x64xf32> -> vector<64x64xf32>
    %c0_5 = arith.constant 0 : index
    %c0_6 = arith.constant 0 : index
    %5 = vector.load %arg4[%c0_5, %c0_6] : memref<64x64xf32, #tpu.memory_space<vmem>>, vector<64x64xf32>
    %6 = arith.mulf %4, %5 : vector<64x64xf32>
    %cst_7 = arith.constant dense<0.000000e+00> : vector<64xf32>
    %7 = vector.multi_reduction <add>, %6, %cst_7 [1] : vector<64x64xf32> to vector<64xf32>
    %8 = vector.shape_cast %7 : vector<64xf32> to vector<64x1xf32>
    %c0_8 = arith.constant 0 : index
    %c0_9 = arith.constant 0 : index
    %9 = vector.load %arg5[%c0_8, %c0_9] : memref<4x64xf32, #tpu.memory_space<vmem>>, vector<4x64xf32>
    %cst_10 = arith.constant dense<0.000000e+00> : vector<4x16xf32>
    %10 = tpu.matmul %9, %3, %cst_10 {dimension_numbers = #tpu.dot_dimension_numbers<[1], [1], [0], [0], [0, 0, 1, 0], [], []>} : vector<4x64xf32>, vector<16x64xf32>, vector<4x16xf32> -> vector<4x16xf32>
    %cst_11 = arith.constant dense<0.000000e+00> : vector<64x16xf32>
    %11 = tpu.matmul %0, %10, %cst_11 {dimension_numbers = #tpu.dot_dimension_numbers<[1], [0], [0], [1], [0, 0, 1, 1], [], []>} : vector<64x4xf32>, vector<4x16xf32>, vector<64x16xf32> -> vector<64x16xf32>
    %12 = vector.broadcast %8 : vector<64x1xf32> to vector<64x16xf32>
    %13 = arith.addf %12, %11 : vector<64x16xf32>
    %c0_12 = arith.constant 0 : index
    %c0_13 = arith.constant 0 : index
    %14 = vector.load %arg6[%c0_12, %c0_13] : memref<64x16xf32, #tpu.memory_space<vmem>>, vector<64x16xf32>
    %15 = arith.addf %13, %14 : vector<64x16xf32>
    %cst_14 = arith.constant 2.000000e-01 : f32
    %16 = vector.broadcast %cst_14 : f32 to vector<64x16xf32>
    %17 = arith.mulf %16, %15 : vector<64x16xf32>
    %18 = arith.maximumf %15, %17 : vector<64x16xf32>
    %cst_15 = arith.constant dense<0xFF800000> : vector<64xf32>
    %19 = vector.multi_reduction <maximumf>, %18, %cst_15 [1] : vector<64x16xf32> to vector<64xf32>
    %20 = vector.shape_cast %19 : vector<64xf32> to vector<64x1xf32>
    %21 = vector.broadcast %20 : vector<64x1xf32> to vector<64x16xf32>
    %22 = arith.subf %18, %21 : vector<64x16xf32>
    %23 = math.exp %22 : vector<64x16xf32>
    %cst_16 = arith.constant dense<0.000000e+00> : vector<64xf32>
    %24 = vector.multi_reduction <add>, %23, %cst_16 [1] : vector<64x16xf32> to vector<64xf32>
    %25 = vector.shape_cast %24 : vector<64xf32> to vector<64x1xf32>
    %26 = tpu.reciprocal %25 {approx = true} : vector<64x1xf32> -> vector<64x1xf32>
    %27 = vector.broadcast %26 : vector<64x1xf32> to vector<64x16xf32>
    %28 = arith.mulf %23, %27 : vector<64x16xf32>
    %29 = vector.extract_strided_slice %28 {offsets = [0, 0], sizes = [16, 16], strides = [1, 1]} : vector<64x16xf32> to vector<16x16xf32>
    %30 = vector.extract_strided_slice %3 {offsets = [0, 0], sizes = [16, 16], strides = [1, 1]} : vector<16x64xf32> to vector<16x16xf32>
    %cst_17 = arith.constant dense<0.000000e+00> : vector<16x16xf32>
    %31 = tpu.matmul %29, %30, %cst_17 {dimension_numbers = #tpu.dot_dimension_numbers<[1], [0], [0], [1], [0, 0, 1, 1], [], []>} : vector<16x16xf32>, vector<16x16xf32>, vector<16x16xf32> -> vector<16x16xf32>
    %32 = vector.extract_strided_slice %28 {offsets = [16, 0], sizes = [16, 16], strides = [1, 1]} : vector<64x16xf32> to vector<16x16xf32>
    %33 = vector.extract_strided_slice %3 {offsets = [0, 16], sizes = [16, 16], strides = [1, 1]} : vector<16x64xf32> to vector<16x16xf32>
    %cst_18 = arith.constant dense<0.000000e+00> : vector<16x16xf32>
    %34 = tpu.matmul %32, %33, %cst_18 {dimension_numbers = #tpu.dot_dimension_numbers<[1], [0], [0], [1], [0, 0, 1, 1], [], []>} : vector<16x16xf32>, vector<16x16xf32>, vector<16x16xf32> -> vector<16x16xf32>
    %35 = vector.extract_strided_slice %28 {offsets = [32, 0], sizes = [16, 16], strides = [1, 1]} : vector<64x16xf32> to vector<16x16xf32>
    %36 = vector.extract_strided_slice %3 {offsets = [0, 32], sizes = [16, 16], strides = [1, 1]} : vector<16x64xf32> to vector<16x16xf32>
    %cst_19 = arith.constant dense<0.000000e+00> : vector<16x16xf32>
    %37 = tpu.matmul %35, %36, %cst_19 {dimension_numbers = #tpu.dot_dimension_numbers<[1], [0], [0], [1], [0, 0, 1, 1], [], []>} : vector<16x16xf32>, vector<16x16xf32>, vector<16x16xf32> -> vector<16x16xf32>
    %38 = vector.extract_strided_slice %28 {offsets = [48, 0], sizes = [16, 16], strides = [1, 1]} : vector<64x16xf32> to vector<16x16xf32>
    %39 = vector.extract_strided_slice %3 {offsets = [0, 48], sizes = [16, 16], strides = [1, 1]} : vector<16x64xf32> to vector<16x16xf32>
    %cst_20 = arith.constant dense<0.000000e+00> : vector<16x16xf32>
    %40 = tpu.matmul %38, %39, %cst_20 {dimension_numbers = #tpu.dot_dimension_numbers<[1], [0], [0], [1], [0, 0, 1, 1], [], []>} : vector<16x16xf32>, vector<16x16xf32>, vector<16x16xf32> -> vector<16x16xf32>
    %41 = tpu.concatenate %31, %34, %37, %40 in 1 : vector<16x16xf32>, vector<16x16xf32>, vector<16x16xf32>, vector<16x16xf32> -> vector<16x64xf32>
    %c0_21 = arith.constant 0 : index
    %c0_22 = arith.constant 0 : index
    %42 = vector.load %arg7[%c0_21, %c0_22] : memref<1x64xf32, #tpu.memory_space<vmem>>, vector<1x64xf32>
    %43 = vector.broadcast %42 : vector<1x64xf32> to vector<16x64xf32>
    %44 = arith.addf %41, %43 : vector<16x64xf32>
    %cst_23 = arith.constant 0.000000e+00 : f32
    %45 = vector.broadcast %cst_23 : f32 to vector<16x64xf32>
    %46 = arith.maximumf %44, %45 : vector<16x64xf32>
    %c0_24 = arith.constant 0 : index
    %c0_25 = arith.constant 0 : index
    %47 = vector.load %arg8[%c0_24, %c0_25] : memref<64x64xf32, #tpu.memory_space<vmem>>, vector<64x64xf32>
    %cst_26 = arith.constant dense<0.000000e+00> : vector<16x64xf32>
    %48 = tpu.matmul %46, %47, %cst_26 {dimension_numbers = #tpu.dot_dimension_numbers<[1], [0], [0], [1], [0, 0, 1, 1], [], []>} : vector<16x64xf32>, vector<64x64xf32>, vector<16x64xf32> -> vector<16x64xf32>
    %49 = tpu.concatenate %48, %48, %48, %48 in 0 : vector<16x64xf32>, vector<16x64xf32>, vector<16x64xf32>, vector<16x64xf32> -> vector<64x64xf32>
    %c0_27 = arith.constant 0 : index
    %c0_28 = arith.constant 0 : index
    %50 = vector.load %arg9[%c0_27, %c0_28] : memref<64x64xf32, #tpu.memory_space<vmem>>, vector<64x64xf32>
    %51 = arith.mulf %49, %50 : vector<64x64xf32>
    %cst_29 = arith.constant dense<0.000000e+00> : vector<64xf32>
    %52 = vector.multi_reduction <add>, %51, %cst_29 [1] : vector<64x64xf32> to vector<64xf32>
    %53 = vector.shape_cast %52 : vector<64xf32> to vector<64x1xf32>
    %c0_30 = arith.constant 0 : index
    %c0_31 = arith.constant 0 : index
    %54 = vector.load %arg10[%c0_30, %c0_31] : memref<4x64xf32, #tpu.memory_space<vmem>>, vector<4x64xf32>
    %cst_32 = arith.constant dense<0.000000e+00> : vector<4x16xf32>
    %55 = tpu.matmul %54, %48, %cst_32 {dimension_numbers = #tpu.dot_dimension_numbers<[1], [1], [0], [0], [0, 0, 1, 0], [], []>} : vector<4x64xf32>, vector<16x64xf32>, vector<4x16xf32> -> vector<4x16xf32>
    %cst_33 = arith.constant dense<0.000000e+00> : vector<64x16xf32>
    %56 = tpu.matmul %0, %55, %cst_33 {dimension_numbers = #tpu.dot_dimension_numbers<[1], [0], [0], [1], [0, 0, 1, 1], [], []>} : vector<64x4xf32>, vector<4x16xf32>, vector<64x16xf32> -> vector<64x16xf32>
    %57 = vector.broadcast %53 : vector<64x1xf32> to vector<64x16xf32>
    %58 = arith.addf %57, %56 : vector<64x16xf32>
    %c0_34 = arith.constant 0 : index
    %c0_35 = arith.constant 0 : index
    %59 = vector.load %arg11[%c0_34, %c0_35] : memref<64x16xf32, #tpu.memory_space<vmem>>, vector<64x16xf32>
    %60 = arith.addf %58, %59 : vector<64x16xf32>
    %cst_36 = arith.constant 2.000000e-01 : f32
    %61 = vector.broadcast %cst_36 : f32 to vector<64x16xf32>
    %62 = arith.mulf %61, %60 : vector<64x16xf32>
    %63 = arith.maximumf %60, %62 : vector<64x16xf32>
    %cst_37 = arith.constant dense<0xFF800000> : vector<64xf32>
    %64 = vector.multi_reduction <maximumf>, %63, %cst_37 [1] : vector<64x16xf32> to vector<64xf32>
    %65 = vector.shape_cast %64 : vector<64xf32> to vector<64x1xf32>
    %66 = vector.broadcast %65 : vector<64x1xf32> to vector<64x16xf32>
    %67 = arith.subf %63, %66 : vector<64x16xf32>
    %68 = math.exp %67 : vector<64x16xf32>
    %cst_38 = arith.constant dense<0.000000e+00> : vector<64xf32>
    %69 = vector.multi_reduction <add>, %68, %cst_38 [1] : vector<64x16xf32> to vector<64xf32>
    %70 = vector.shape_cast %69 : vector<64xf32> to vector<64x1xf32>
    %71 = tpu.reciprocal %70 {approx = true} : vector<64x1xf32> -> vector<64x1xf32>
    %72 = vector.broadcast %71 : vector<64x1xf32> to vector<64x16xf32>
    %73 = arith.mulf %68, %72 : vector<64x16xf32>
    %74 = vector.extract_strided_slice %73 {offsets = [0, 0], sizes = [16, 16], strides = [1, 1]} : vector<64x16xf32> to vector<16x16xf32>
    %75 = vector.extract_strided_slice %48 {offsets = [0, 0], sizes = [16, 16], strides = [1, 1]} : vector<16x64xf32> to vector<16x16xf32>
    %cst_39 = arith.constant dense<0.000000e+00> : vector<16x16xf32>
    %76 = tpu.matmul %74, %75, %cst_39 {dimension_numbers = #tpu.dot_dimension_numbers<[1], [0], [0], [1], [0, 0, 1, 1], [], []>} : vector<16x16xf32>, vector<16x16xf32>, vector<16x16xf32> -> vector<16x16xf32>
    %77 = vector.extract_strided_slice %73 {offsets = [16, 0], sizes = [16, 16], strides = [1, 1]} : vector<64x16xf32> to vector<16x16xf32>
    %78 = vector.extract_strided_slice %48 {offsets = [0, 16], sizes = [16, 16], strides = [1, 1]} : vector<16x64xf32> to vector<16x16xf32>
    %cst_40 = arith.constant dense<0.000000e+00> : vector<16x16xf32>
    %79 = tpu.matmul %77, %78, %cst_40 {dimension_numbers = #tpu.dot_dimension_numbers<[1], [0], [0], [1], [0, 0, 1, 1], [], []>} : vector<16x16xf32>, vector<16x16xf32>, vector<16x16xf32> -> vector<16x16xf32>
    %80 = vector.extract_strided_slice %73 {offsets = [32, 0], sizes = [16, 16], strides = [1, 1]} : vector<64x16xf32> to vector<16x16xf32>
    %81 = vector.extract_strided_slice %48 {offsets = [0, 32], sizes = [16, 16], strides = [1, 1]} : vector<16x64xf32> to vector<16x16xf32>
    %cst_41 = arith.constant dense<0.000000e+00> : vector<16x16xf32>
    %82 = tpu.matmul %80, %81, %cst_41 {dimension_numbers = #tpu.dot_dimension_numbers<[1], [0], [0], [1], [0, 0, 1, 1], [], []>} : vector<16x16xf32>, vector<16x16xf32>, vector<16x16xf32> -> vector<16x16xf32>
    %83 = vector.extract_strided_slice %73 {offsets = [48, 0], sizes = [16, 16], strides = [1, 1]} : vector<64x16xf32> to vector<16x16xf32>
    %84 = vector.extract_strided_slice %48 {offsets = [0, 48], sizes = [16, 16], strides = [1, 1]} : vector<16x64xf32> to vector<16x16xf32>
    %cst_42 = arith.constant dense<0.000000e+00> : vector<16x16xf32>
    %85 = tpu.matmul %83, %84, %cst_42 {dimension_numbers = #tpu.dot_dimension_numbers<[1], [0], [0], [1], [0, 0, 1, 1], [], []>} : vector<16x16xf32>, vector<16x16xf32>, vector<16x16xf32> -> vector<16x16xf32>
    %86 = tpu.concatenate %76, %79, %82, %85 in 1 : vector<16x16xf32>, vector<16x16xf32>, vector<16x16xf32>, vector<16x16xf32> -> vector<16x64xf32>
    %c0_43 = arith.constant 0 : index
    %c0_44 = arith.constant 0 : index
    %87 = vector.load %arg12[%c0_43, %c0_44] : memref<1x64xf32, #tpu.memory_space<vmem>>, vector<1x64xf32>
    %88 = vector.broadcast %87 : vector<1x64xf32> to vector<16x64xf32>
    %89 = arith.addf %86, %88 : vector<16x64xf32>
    %cst_45 = arith.constant 0.000000e+00 : f32
    %90 = vector.broadcast %cst_45 : f32 to vector<16x64xf32>
    %91 = arith.maximumf %89, %90 : vector<16x64xf32>
    %c0_46 = arith.constant 0 : index
    %c0_47 = arith.constant 0 : index
    %92 = vector.load %arg13[%c0_46, %c0_47] : memref<64x64xf32, #tpu.memory_space<vmem>>, vector<64x64xf32>
    %cst_48 = arith.constant dense<0.000000e+00> : vector<16x64xf32>
    %93 = tpu.matmul %91, %92, %cst_48 {dimension_numbers = #tpu.dot_dimension_numbers<[1], [0], [0], [1], [0, 0, 1, 1], [], []>} : vector<16x64xf32>, vector<64x64xf32>, vector<16x64xf32> -> vector<16x64xf32>
    %94 = tpu.concatenate %93, %93, %93, %93 in 0 : vector<16x64xf32>, vector<16x64xf32>, vector<16x64xf32>, vector<16x64xf32> -> vector<64x64xf32>
    %c0_49 = arith.constant 0 : index
    %c0_50 = arith.constant 0 : index
    %95 = vector.load %arg14[%c0_49, %c0_50] : memref<64x64xf32, #tpu.memory_space<vmem>>, vector<64x64xf32>
    %96 = arith.mulf %94, %95 : vector<64x64xf32>
    %cst_51 = arith.constant dense<0.000000e+00> : vector<64xf32>
    %97 = vector.multi_reduction <add>, %96, %cst_51 [1] : vector<64x64xf32> to vector<64xf32>
    %98 = vector.shape_cast %97 : vector<64xf32> to vector<64x1xf32>
    %c0_52 = arith.constant 0 : index
    %c0_53 = arith.constant 0 : index
    %99 = vector.load %arg15[%c0_52, %c0_53] : memref<4x64xf32, #tpu.memory_space<vmem>>, vector<4x64xf32>
    %cst_54 = arith.constant dense<0.000000e+00> : vector<4x16xf32>
    %100 = tpu.matmul %99, %93, %cst_54 {dimension_numbers = #tpu.dot_dimension_numbers<[1], [1], [0], [0], [0, 0, 1, 0], [], []>} : vector<4x64xf32>, vector<16x64xf32>, vector<4x16xf32> -> vector<4x16xf32>
    %cst_55 = arith.constant dense<0.000000e+00> : vector<64x16xf32>
    %101 = tpu.matmul %0, %100, %cst_55 {dimension_numbers = #tpu.dot_dimension_numbers<[1], [0], [0], [1], [0, 0, 1, 1], [], []>} : vector<64x4xf32>, vector<4x16xf32>, vector<64x16xf32> -> vector<64x16xf32>
    %102 = vector.broadcast %98 : vector<64x1xf32> to vector<64x16xf32>
    %103 = arith.addf %102, %101 : vector<64x16xf32>
    %c0_56 = arith.constant 0 : index
    %c0_57 = arith.constant 0 : index
    %104 = vector.load %arg16[%c0_56, %c0_57] : memref<64x16xf32, #tpu.memory_space<vmem>>, vector<64x16xf32>
    %105 = arith.addf %103, %104 : vector<64x16xf32>
    %cst_58 = arith.constant 2.000000e-01 : f32
    %106 = vector.broadcast %cst_58 : f32 to vector<64x16xf32>
    %107 = arith.mulf %106, %105 : vector<64x16xf32>
    %108 = arith.maximumf %105, %107 : vector<64x16xf32>
    %cst_59 = arith.constant dense<0xFF800000> : vector<64xf32>
    %109 = vector.multi_reduction <maximumf>, %108, %cst_59 [1] : vector<64x16xf32> to vector<64xf32>
    %110 = vector.shape_cast %109 : vector<64xf32> to vector<64x1xf32>
    %111 = vector.broadcast %110 : vector<64x1xf32> to vector<64x16xf32>
    %112 = arith.subf %108, %111 : vector<64x16xf32>
    %113 = math.exp %112 : vector<64x16xf32>
    %cst_60 = arith.constant dense<0.000000e+00> : vector<64xf32>
    %114 = vector.multi_reduction <add>, %113, %cst_60 [1] : vector<64x16xf32> to vector<64xf32>
    %115 = vector.shape_cast %114 : vector<64xf32> to vector<64x1xf32>
    %116 = tpu.reciprocal %115 {approx = true} : vector<64x1xf32> -> vector<64x1xf32>
    %117 = vector.broadcast %116 : vector<64x1xf32> to vector<64x16xf32>
    %118 = arith.mulf %113, %117 : vector<64x16xf32>
    %119 = vector.extract_strided_slice %118 {offsets = [0, 0], sizes = [16, 16], strides = [1, 1]} : vector<64x16xf32> to vector<16x16xf32>
    %120 = vector.extract_strided_slice %93 {offsets = [0, 0], sizes = [16, 16], strides = [1, 1]} : vector<16x64xf32> to vector<16x16xf32>
    %cst_61 = arith.constant dense<0.000000e+00> : vector<16x16xf32>
    %121 = tpu.matmul %119, %120, %cst_61 {dimension_numbers = #tpu.dot_dimension_numbers<[1], [0], [0], [1], [0, 0, 1, 1], [], []>} : vector<16x16xf32>, vector<16x16xf32>, vector<16x16xf32> -> vector<16x16xf32>
    %122 = vector.extract_strided_slice %118 {offsets = [16, 0], sizes = [16, 16], strides = [1, 1]} : vector<64x16xf32> to vector<16x16xf32>
    %123 = vector.extract_strided_slice %93 {offsets = [0, 16], sizes = [16, 16], strides = [1, 1]} : vector<16x64xf32> to vector<16x16xf32>
    %cst_62 = arith.constant dense<0.000000e+00> : vector<16x16xf32>
    %124 = tpu.matmul %122, %123, %cst_62 {dimension_numbers = #tpu.dot_dimension_numbers<[1], [0], [0], [1], [0, 0, 1, 1], [], []>} : vector<16x16xf32>, vector<16x16xf32>, vector<16x16xf32> -> vector<16x16xf32>
    %125 = vector.extract_strided_slice %118 {offsets = [32, 0], sizes = [16, 16], strides = [1, 1]} : vector<64x16xf32> to vector<16x16xf32>
    %126 = vector.extract_strided_slice %93 {offsets = [0, 32], sizes = [16, 16], strides = [1, 1]} : vector<16x64xf32> to vector<16x16xf32>
    %cst_63 = arith.constant dense<0.000000e+00> : vector<16x16xf32>
    %127 = tpu.matmul %125, %126, %cst_63 {dimension_numbers = #tpu.dot_dimension_numbers<[1], [0], [0], [1], [0, 0, 1, 1], [], []>} : vector<16x16xf32>, vector<16x16xf32>, vector<16x16xf32> -> vector<16x16xf32>
    %128 = vector.extract_strided_slice %118 {offsets = [48, 0], sizes = [16, 16], strides = [1, 1]} : vector<64x16xf32> to vector<16x16xf32>
    %129 = vector.extract_strided_slice %93 {offsets = [0, 48], sizes = [16, 16], strides = [1, 1]} : vector<16x64xf32> to vector<16x16xf32>
    %cst_64 = arith.constant dense<0.000000e+00> : vector<16x16xf32>
    %130 = tpu.matmul %128, %129, %cst_64 {dimension_numbers = #tpu.dot_dimension_numbers<[1], [0], [0], [1], [0, 0, 1, 1], [], []>} : vector<16x16xf32>, vector<16x16xf32>, vector<16x16xf32> -> vector<16x16xf32>
    %131 = tpu.concatenate %121, %124, %127, %130 in 1 : vector<16x16xf32>, vector<16x16xf32>, vector<16x16xf32>, vector<16x16xf32> -> vector<16x64xf32>
    %c0_65 = arith.constant 0 : index
    %c0_66 = arith.constant 0 : index
    %132 = vector.load %arg17[%c0_65, %c0_66] : memref<1x64xf32, #tpu.memory_space<vmem>>, vector<1x64xf32>
    %133 = vector.broadcast %132 : vector<1x64xf32> to vector<16x64xf32>
    %134 = arith.addf %131, %133 : vector<16x64xf32>
    %cst_67 = arith.constant 0.000000e+00 : f32
    %135 = vector.broadcast %cst_67 : f32 to vector<16x64xf32>
    %136 = arith.maximumf %134, %135 : vector<16x64xf32>
    %c0_68 = arith.constant 0 : index
    %c0_69 = arith.constant 0 : index
    %137 = vector.load %arg18[%c0_68, %c0_69] : memref<64x4xf32, #tpu.memory_space<vmem>>, vector<64x4xf32>
    %cst_70 = arith.constant dense<0.000000e+00> : vector<16x4xf32>
    %138 = tpu.matmul %136, %137, %cst_70 {dimension_numbers = #tpu.dot_dimension_numbers<[1], [0], [0], [1], [0, 0, 1, 1], [], []>} : vector<16x64xf32>, vector<64x4xf32>, vector<16x4xf32> -> vector<16x4xf32>
    %c0_71 = arith.constant 0 : index
    %c0_72 = arith.constant 0 : index
    %139 = vector.load %arg19[%c0_71, %c0_72] : memref<1x4xf32, #tpu.memory_space<vmem>>, vector<1x4xf32>
    %140 = vector.broadcast %139 : vector<1x4xf32> to vector<16x4xf32>
    %141 = arith.addf %138, %140 : vector<16x4xf32>
    %cst_73 = arith.constant 0.000000e+00 : f32
    %142 = vector.broadcast %cst_73 : f32 to vector<16x4xf32>
    %143 = arith.maximumf %141, %142 : vector<16x4xf32>
    %144 = tpu.concatenate %143, %143, %143, %143, %143, %143, %143, %143 in 1 : vector<16x4xf32>, vector<16x4xf32>, vector<16x4xf32>, vector<16x4xf32>, vector<16x4xf32>, vector<16x4xf32>, vector<16x4xf32>, vector<16x4xf32> -> vector<16x32xf32>
    %c0_74 = arith.constant 0 : index
    %c0_75 = arith.constant 0 : index
    %145 = vector.load %arg21[%c0_74, %c0_75] : memref<16x32xf32, #tpu.memory_space<vmem>>, vector<16x32xf32>
    %146 = arith.mulf %144, %145 : vector<16x32xf32>
    %c0_76 = arith.constant 0 : index
    %c0_77 = arith.constant 0 : index
    %147 = vector.load %arg20[%c0_76, %c0_77] : memref<32x8xf32, #tpu.memory_space<vmem>>, vector<32x8xf32>
    %cst_78 = arith.constant dense<0.000000e+00> : vector<16x8xf32>
    %148 = tpu.matmul %146, %147, %cst_78 {dimension_numbers = #tpu.dot_dimension_numbers<[1], [0], [0], [1], [0, 0, 1, 1], [], []>} : vector<16x32xf32>, vector<32x8xf32>, vector<16x8xf32> -> vector<16x8xf32>
    %c0_79 = arith.constant 0 : index
    %c0_80 = arith.constant 0 : index
    %149 = vector.load %arg22[%c0_79, %c0_80] : memref<2x16xf32, #tpu.memory_space<vmem>>, vector<2x16xf32>
    %cst_81 = arith.constant dense<0.000000e+00> : vector<2x8xf32>
    %150 = tpu.matmul %149, %148, %cst_81 {dimension_numbers = #tpu.dot_dimension_numbers<[1], [0], [0], [1], [0, 0, 1, 1], [], []>} : vector<2x16xf32>, vector<16x8xf32>, vector<2x8xf32> -> vector<2x8xf32>
    %c0_82 = arith.constant 0 : index
    %c0_83 = arith.constant 0 : index
    %151 = vector.load %arg23[%c0_82, %c0_83] : memref<1x8xf32, #tpu.memory_space<vmem>>, vector<1x8xf32>
    %152 = vector.broadcast %151 : vector<1x8xf32> to vector<2x8xf32>
    %153 = arith.addf %150, %152 : vector<2x8xf32>
    %c0_84 = arith.constant 0 : index
    %c0_85 = arith.constant 0 : index
    %154 = vector.load %arg24[%c0_84, %c0_85] : memref<2x8xf32, #tpu.memory_space<vmem>>, vector<2x8xf32>
    tpu.vector_store %arg24[%c0_84, %c0_85], %153 {strides = array<i32>} : memref<2x8xf32, #tpu.memory_space<vmem>>, vector<2x8xf32>,
    return
  }
  func.func @transform_0(%arg0: i32) -> (i32, i32) {
    %c0_i32 = arith.constant 0 : i32
    %c0_i32_0 = arith.constant 0 : i32
    %c0_i32_1 = arith.constant 0 : i32
    return %c0_i32, %c0_i32_0 : i32, i32
  }
  func.func @transform_1(%arg0: i32) -> (i32, i32) {
    %c0_i32 = arith.constant 0 : i32
    %c0_i32_0 = arith.constant 0 : i32
    %c0_i32_1 = arith.constant 0 : i32
    return %c0_i32, %c0_i32_0 : i32, i32
  }
  func.func @transform_2(%arg0: i32) -> (i32, i32) {
    %c0_i32 = arith.constant 0 : i32
    %c0_i32_0 = arith.constant 0 : i32
    %c0_i32_1 = arith.constant 0 : i32
    return %c0_i32, %c0_i32_0 : i32, i32
  }
  func.func @transform_3(%arg0: i32) -> (i32, i32) {
    %c0_i32 = arith.constant 0 : i32
    %c0_i32_0 = arith.constant 0 : i32
    %c0_i32_1 = arith.constant 0 : i32
    return %c0_i32, %c0_i32_0 : i32, i32
  }
  func.func @transform_4(%arg0: i32) -> (i32, i32) {
    %c0_i32 = arith.constant 0 : i32
    %c0_i32_0 = arith.constant 0 : i32
    %c0_i32_1 = arith.constant 0 : i32
    return %c0_i32, %c0_i32_0 : i32, i32
  }
  func.func @transform_5(%arg0: i32) -> (i32, i32) {
    %c0_i32 = arith.constant 0 : i32
    %c0_i32_0 = arith.constant 0 : i32
    %c0_i32_1 = arith.constant 0 : i32
    return %c0_i32, %c0_i32_0 : i32, i32
  }
  func.func @transform_6(%arg0: i32) -> (i32, i32) {
    %c0_i32 = arith.constant 0 : i32
    %c0_i32_0 = arith.constant 0 : i32
    %c0_i32_1 = arith.constant 0 : i32
    return %c0_i32, %c0_i32_0 : i32, i32
  }
  func.func @transform_7(%arg0: i32) -> (i32, i32) {
    %c0_i32 = arith.constant 0 : i32
    %c0_i32_0 = arith.constant 0 : i32
    %c0_i32_1 = arith.constant 0 : i32
    return %c0_i32, %c0_i32_0 : i32, i32
  }
  func.func @transform_8(%arg0: i32) -> (i32, i32) {
    %c0_i32 = arith.constant 0 : i32
    %c0_i32_0 = arith.constant 0 : i32
    %c0_i32_1 = arith.constant 0 : i32
    return %c0_i32, %c0_i32_0 : i32, i32
  }
  func.func @transform_9(%arg0: i32) -> (i32, i32) {
    %c0_i32 = arith.constant 0 : i32
    %c0_i32_0 = arith.constant 0 : i32
    %c0_i32_1 = arith.constant 0 : i32
    return %c0_i32, %c0_i32_0 : i32, i32
  }
  func.func @transform_10(%arg0: i32) -> (i32, i32) {
    %c0_i32 = arith.constant 0 : i32
    %c0_i32_0 = arith.constant 0 : i32
    %c0_i32_1 = arith.constant 0 : i32
    return %c0_i32, %c0_i32_0 : i32, i32
  }
  func.func @transform_11(%arg0: i32) -> (i32, i32) {
    %c0_i32 = arith.constant 0 : i32
    %c0_i32_0 = arith.constant 0 : i32
    %c0_i32_1 = arith.constant 0 : i32
    return %c0_i32, %c0_i32_0 : i32, i32
  }
  func.func @transform_12(%arg0: i32) -> (i32, i32) {
    %c0_i32 = arith.constant 0 : i32
    %c0_i32_0 = arith.constant 0 : i32
    %c0_i32_1 = arith.constant 0 : i32
    return %c0_i32, %c0_i32_0 : i32, i32
  }
  func.func @transform_13(%arg0: i32) -> (i32, i32) {
    %c0_i32 = arith.constant 0 : i32
    %c0_i32_0 = arith.constant 0 : i32
    %c0_i32_1 = arith.constant 0 : i32
    return %c0_i32, %c0_i32_0 : i32, i32
  }
  func.func @transform_14(%arg0: i32) -> (i32, i32) {
    %c0_i32 = arith.constant 0 : i32
    %c0_i32_0 = arith.constant 0 : i32
    %c0_i32_1 = arith.constant 0 : i32
    return %c0_i32, %c0_i32_0 : i32, i32
  }
  func.func @transform_15(%arg0: i32) -> (i32, i32) {
    %c0_i32 = arith.constant 0 : i32
    %c0_i32_0 = arith.constant 0 : i32
    %c0_i32_1 = arith.constant 0 : i32
    return %c0_i32, %c0_i32_0 : i32, i32
  }
  func.func @transform_16(%arg0: i32) -> (i32, i32) {
    %c0_i32 = arith.constant 0 : i32
    %c0_i32_0 = arith.constant 0 : i32
    %c0_i32_1 = arith.constant 0 : i32
    return %c0_i32, %c0_i32_0 : i32, i32
  }
  func.func @transform_17(%arg0: i32) -> (i32, i32) {
    %c0_i32 = arith.constant 0 : i32
    %c0_i32_0 = arith.constant 0 : i32
    %c0_i32_1 = arith.constant 0 : i32
    return %c0_i32, %c0_i32_0 : i32, i32
  }
  func.func @transform_18(%arg0: i32) -> (i32, i32) {
    %c0_i32 = arith.constant 0 : i32
    %c0_i32_0 = arith.constant 0 : i32
    %c0_i32_1 = arith.constant 0 : i32
    return %c0_i32, %c0_i32_0 : i32, i32
  }
  func.func @transform_19(%arg0: i32) -> (i32, i32) {
    %c0_i32 = arith.constant 0 : i32
    %c0_i32_0 = arith.constant 0 : i32
    %c0_i32_1 = arith.constant 0 : i32
    return %c0_i32, %c0_i32_0 : i32, i32
  }
  func.func @transform_20(%arg0: i32) -> (i32, i32) {
    %c0_i32 = arith.constant 0 : i32
    %c0_i32_0 = arith.constant 0 : i32
    %c0_i32_1 = arith.constant 0 : i32
    return %c0_i32, %c0_i32_0 : i32, i32
  }
  func.func @transform_21(%arg0: i32) -> (i32, i32) {
    %c0_i32 = arith.constant 0 : i32
    %c0_i32_0 = arith.constant 0 : i32
    %c0_i32_1 = arith.constant 0 : i32
    return %c0_i32, %c0_i32_0 : i32, i32
  }
  func.func @transform_22(%arg0: i32) -> (i32, i32) {
    %c0_i32 = arith.constant 0 : i32
    %c0_i32_0 = arith.constant 0 : i32
    %c0_i32_1 = arith.constant 0 : i32
    return %c0_i32, %c0_i32_0 : i32, i32
  }
  func.func @transform_23(%arg0: i32) -> (i32, i32) {
    %c0_i32 = arith.constant 0 : i32
    %c0_i32_0 = arith.constant 0 : i32
    %c0_i32_1 = arith.constant 0 : i32
    return %c0_i32, %c0_i32_0 : i32, i32
  }
}

</mosaic_0001>

<llo_original>
// kernel: model_forward.1
$region0: #{model_forward.1}
  #allocation0 [shape = 'u32[]', space=smem, size = 0x4, offset = 0x4, fixed_abs, tag = 'smem constant byte address 0x4 - core index']
  #allocation1 [shape = 'u32[72,128]{1,0:T(1,128)}', space=vmem, size = 0x9000, scoped, tag = 'internal scratch']
  %s0 = inlined_call_operand.vmem [shape: f32[16,8], index: 0, kind: input, shape index: {}]
  %s1 = inlined_call_operand.vmem [shape: f32[64,4], index: 1, kind: input, shape index: {}]
  %s2 = inlined_call_operand.vmem [shape: f32[8,64], index: 2, kind: input, shape index: {}]
  %s3 = inlined_call_operand.vmem [shape: f32[64,64], index: 3, kind: input, shape index: {}]
  %s4 = inlined_call_operand.vmem [shape: f32[4,64], index: 4, kind: input, shape index: {}]
  %s5 = inlined_call_operand.vmem [shape: f32[64,16], index: 5, kind: input, shape index: {}]
  %s6 = inlined_call_operand.vmem [shape: f32[1,64], index: 6, kind: input, shape index: {}]
  %s7 = inlined_call_operand.vmem [shape: f32[64,64], index: 7, kind: input, shape index: {}]
  %s8 = inlined_call_operand.vmem [shape: f32[64,64], index: 8, kind: input, shape index: {}]
  %s9 = inlined_call_operand.vmem [shape: f32[4,64], index: 9, kind: input, shape index: {}]
  %s10 = inlined_call_operand.vmem [shape: f32[64,16], index: 10, kind: input, shape index: {}]
  %s11 = inlined_call_operand.vmem [shape: f32[1,64], index: 11, kind: input, shape index: {}]
  %s12 = inlined_call_operand.vmem [shape: f32[64,64], index: 12, kind: input, shape index: {}]
  %s13 = inlined_call_operand.vmem [shape: f32[64,64], index: 13, kind: input, shape index: {}]
  %s14 = inlined_call_operand.vmem [shape: f32[4,64], index: 14, kind: input, shape index: {}]
  %s15 = inlined_call_operand.vmem [shape: f32[64,16], index: 15, kind: input, shape index: {}]
  %s16 = inlined_call_operand.vmem [shape: f32[1,64], index: 16, kind: input, shape index: {}]
  %s17 = inlined_call_operand.vmem [shape: f32[64,4], index: 17, kind: input, shape index: {}]
  %s18 = inlined_call_operand.vmem [shape: f32[1,4], index: 18, kind: input, shape index: {}]
  %s19 = inlined_call_operand.vmem [shape: f32[32,8], index: 19, kind: input, shape index: {}]
  %s20 = inlined_call_operand.vmem [shape: f32[16,32], index: 20, kind: input, shape index: {}]
  %s21 = inlined_call_operand.vmem [shape: f32[2,16], index: 21, kind: input, shape index: {}]
  %s22 = inlined_call_operand.vmem [shape: f32[1,8], index: 22, kind: input, shape index: {}]
  %s23 = inlined_call_operand.hbm [shape: f32[2,8], index: 23, kind: output, shape index: {}]
  %s24 = sld [smem:[#allocation0]]
  $region102: #{model_forward.1} parent=0
    _
  %s26 = ssub.s32 1, %s24
  %s27 = scalar_select 0, %s26, %s24
  $region1: #{model_forward.1} parent=0
    #allocation2 [shape = 'u8[1024]{0}', space=vmem, size = 0x400, scoped, tag = 'output window, operand 0, single buffered']
    #allocation3 [shape = 's32[1]{0}', space=sflag, size = 0x4, scoped, tag = 'scoped memory for model_forward.1']
    %28 = vsyncpa [#allocation3], 0
    // Predicated region
    $region2: #{model_forward.1} parent=1 // pred_check
      _
    $region3: #{model_forward.1} parent=1 // pred_check_branch
      %30 = sbr.rel (0) target = $region5
    $region4: #{model_forward.1} parent=1 // pred_region
      _
    $region5: #{model_forward.1} parent=1 // pred_fallthru
      _
    // Predicated region
    $region6: #{model_forward.1} parent=1 // pred_check
      _
    $region7: #{model_forward.1} parent=1 // pred_check_branch
      %32 = sbr.rel (0) target = $region9
    $region8: #{model_forward.1} parent=1 // pred_region
      _
    $region9: #{model_forward.1} parent=1 // pred_fallthru
      _
    // Predicated region
    $region10: #{model_forward.1} parent=1 // pred_check
      _
    $region11: #{model_forward.1} parent=1 // pred_check_branch
      %34 = sbr.rel (0) target = $region13
    $region12: #{model_forward.1} parent=1 // pred_region
      _
    $region13: #{model_forward.1} parent=1 // pred_fallthru
      _
    // Predicated region
    $region14: #{model_forward.1} parent=1 // pred_check
      _
    $region15: #{model_forward.1} parent=1 // pred_check_branch
      %36 = sbr.rel (0) target = $region17
    $region16: #{model_forward.1} parent=1 // pred_region
      _
    $region17: #{model_forward.1} parent=1 // pred_fallthru
      _
    // Predicated region
    $region18: #{model_forward.1} parent=1 // pred_check
      _
    $region19: #{model_forward.1} parent=1 // pred_check_branch
      %38 = sbr.rel (0) target = $region21
    $region20: #{model_forward.1} parent=1 // pred_region
      _
    $region21: #{model_forward.1} parent=1 // pred_fallthru
      _
    // Predicated region
    $region22: #{model_forward.1} parent=1 // pred_check
      _
    $region23: #{model_forward.1} parent=1 // pred_check_branch
      %40 = sbr.rel (0) target = $region25
    $region24: #{model_forward.1} parent=1 // pred_region
      _
    $region25: #{model_forward.1} parent=1 // pred_fallthru
      _
    // Predicated region
    $region26: #{model_forward.1} parent=1 // pred_check
      _
    $region27: #{model_forward.1} parent=1 // pred_check_branch
      %42 = sbr.rel (0) target = $region29
    $region28: #{model_forward.1} parent=1 // pred_region
      _
    $region29: #{model_forward.1} parent=1 // pred_fallthru
      _
    // Predicated region
    $region30: #{model_forward.1} parent=1 // pred_check
      _
    $region31: #{model_forward.1} parent=1 // pred_check_branch
      %44 = sbr.rel (0) target = $region33
    $region32: #{model_forward.1} parent=1 // pred_region
      _
    $region33: #{model_forward.1} parent=1 // pred_fallthru
      _
    // Predicated region
    $region34: #{model_forward.1} parent=1 // pred_check
      _
    $region35: #{model_forward.1} parent=1 // pred_check_branch
      %46 = sbr.rel (0) target = $region37
    $region36: #{model_forward.1} parent=1 // pred_region
      _
    $region37: #{model_forward.1} parent=1 // pred_fallthru
      _
    // Predicated region
    $region38: #{model_forward.1} parent=1 // pred_check
      _
    $region39: #{model_forward.1} parent=1 // pred_check_branch
      %48 = sbr.rel (0) target = $region41
    $region40: #{model_forward.1} parent=1 // pred_region
      _
    $region41: #{model_forward.1} parent=1 // pred_fallthru
      _
    // Predicated region
    $region42: #{model_forward.1} parent=1 // pred_check
      _
    $region43: #{model_forward.1} parent=1 // pred_check_branch
      %50 = sbr.rel (0) target = $region45
    $region44: #{model_forward.1} parent=1 // pred_region
      _
    $region45: #{model_forward.1} parent=1 // pred_fallthru
      _
    // Predicated region
    $region46: #{model_forward.1} parent=1 // pred_check
      _
    $region47: #{model_forward.1} parent=1 // pred_check_branch
      %52 = sbr.rel (0) target = $region49
    $region48: #{model_forward.1} parent=1 // pred_region
      _
    $region49: #{model_forward.1} parent=1 // pred_fallthru
      _
    // Predicated region
    $region50: #{model_forward.1} parent=1 // pred_check
      _
    $region51: #{model_forward.1} parent=1 // pred_check_branch
      %54 = sbr.rel (0) target = $region53
    $region52: #{model_forward.1} parent=1 // pred_region
      _
    $region53: #{model_forward.1} parent=1 // pred_fallthru
      _
    // Predicated region
    $region54: #{model_forward.1} parent=1 // pred_check
      _
    $region55: #{model_forward.1} parent=1 // pred_check_branch
      %56 = sbr.rel (0) target = $region57
    $region56: #{model_forward.1} parent=1 // pred_region
      _
    $region57: #{model_forward.1} parent=1 // pred_fallthru
      _
    // Predicated region
    $region58: #{model_forward.1} parent=1 // pred_check
      _
    $region59: #{model_forward.1} parent=1 // pred_check_branch
      %58 = sbr.rel (0) target = $region61
    $region60: #{model_forward.1} parent=1 // pred_region
      _
    $region61: #{model_forward.1} parent=1 // pred_fallthru
      _
    // Predicated region
    $region62: #{model_forward.1} parent=1 // pred_check
      _
    $region63: #{model_forward.1} parent=1 // pred_check_branch
      %60 = sbr.rel (0) target = $region65
    $region64: #{model_forward.1} parent=1 // pred_region
      _
    $region65: #{model_forward.1} parent=1 // pred_fallthru
      _
    // Predicated region
    $region66: #{model_forward.1} parent=1 // pred_check
      _
    $region67: #{model_forward.1} parent=1 // pred_check_branch
      %62 = sbr.rel (0) target = $region69
    $region68: #{model_forward.1} parent=1 // pred_region
      _
    $region69: #{model_forward.1} parent=1 // pred_fallthru
      _
    // Predicated region
    $region70: #{model_forward.1} parent=1 // pred_check
      _
    $region71: #{model_forward.1} parent=1 // pred_check_branch
      %64 = sbr.rel (0) target = $region73
    $region72: #{model_forward.1} parent=1 // pred_region
      _
    $region73: #{model_forward.1} parent=1 // pred_fallthru
      _
    // Predicated region
    $region74: #{model_forward.1} parent=1 // pred_check
      _
    $region75: #{model_forward.1} parent=1 // pred_check_branch
      %66 = sbr.rel (0) target = $region77
    $region76: #{model_forward.1} parent=1 // pred_region
      _
    $region77: #{model_forward.1} parent=1 // pred_fallthru
      _
    // Predicated region
    $region78: #{model_forward.1} parent=1 // pred_check
      _
    $region79: #{model_forward.1} parent=1 // pred_check_branch
      %68 = sbr.rel (0) target = $region81
    $region80: #{model_forward.1} parent=1 // pred_region
      _
    $region81: #{model_forward.1} parent=1 // pred_fallthru
      _
    // Predicated region
    $region82: #{model_forward.1} parent=1 // pred_check
      _
    $region83: #{model_forward.1} parent=1 // pred_check_branch
      %70 = sbr.rel (0) target = $region85
    $region84: #{model_forward.1} parent=1 // pred_region
      _
    $region85: #{model_forward.1} parent=1 // pred_fallthru
      _
    // Predicated region
    $region86: #{model_forward.1} parent=1 // pred_check
      _
    $region87: #{model_forward.1} parent=1 // pred_check_branch
      %72 = sbr.rel (0) target = $region89
    $region88: #{model_forward.1} parent=1 // pred_region
      _
    $region89: #{model_forward.1} parent=1 // pred_fallthru
      _
    // Predicated region
    $region90: #{model_forward.1} parent=1 // pred_check
      _
    $region91: #{model_forward.1} parent=1 // pred_check_branch
      %74 = sbr.rel (0) target = $region93
    $region92: #{model_forward.1} parent=1 // pred_region
      _
    $region93: #{model_forward.1} parent=1 // pred_fallthru
      _
    %v75 = vld [vmem:[%s1] sm:$0xff]
    %v76 = vld [vmem:[%s1 + $0x8] sm:$0xff]
    %v77 = vld [vmem:[%s1 + $0x10] sm:$0xff]
    %v78 = vld [vmem:[%s1 + $0x18] sm:$0xff]
    %v79 = vld [vmem:[%s1 + $0x20] sm:$0xff]
    %v80 = vld [vmem:[%s1 + $0x28] sm:$0xff]
    %v81 = vld [vmem:[%s1 + $0x30] sm:$0xff]
    %v82 = vld [vmem:[%s1 + $0x38] sm:$0xff]
    %v83 = vld [vmem:[%s0] sm:$0xff]
    %v84 = vld [vmem:[%s0 + $0x8] sm:$0xff]
    %v85 = vld [vmem:[%s2] sm:$0xff]
    %vm86 = vcmask 64512
    %v88 = vsel %vm86, %v83, 0
    %v91 = vsel %vm86, %v84, 0
    %93 = vmatpush.msra.mxu0 0.0
    %94 = vmatpush.msra.mxu0 0.0
    %95 = vmatpush.msra.mxu0 0.0
    %96 = vmatpush.msra.mxu0 0.0
    %97 = vmatpush.msra.mxu0 0.0
    %98 = vmatpush.msra.mxu0 0.0
    %99 = vmatpush.msra.mxu0 0.0
    %100 = vmatpush.msra.mxu0 0.0
    %101 = vmatpush.msra.mxu0 0.0
    %102 = vmatpush.msra.mxu0 0.0
    %103 = vmatpush.msra.mxu0 0.0
    %104 = vmatpush.msra.mxu0 0.0
    %105 = vmatpush.msra.mxu0 0.0
    %106 = vmatpush.msra.mxu0 0.0
    %107 = vmatpush.msra.mxu0 0.0
    %108 = vmatpush.msra.mxu0 %v85
    %109 = vmatmul.f32.gmra.mxu0 %v88
    %v110 = vpop.f32.mrf.mxu0
    %v111 = vadd.f32 0.0, %v110
    %112 = vmatmul.f32.gmra.mxu0 %v91
    %v113 = vpop.f32.mrf.mxu0
    %v114 = vadd.f32 0.0, %v113
    %115 = vdwg.mxu0
    %v116 = vld [vmem:[%s3] sm:$0xff]
    %v117 = vld [vmem:[%s3 + $0x8] sm:$0xff]
    %v118 = vld [vmem:[%s3 + $0x10] sm:$0xff]
    %v119 = vld [vmem:[%s3 + $0x18] sm:$0xff]
    %v120 = vld [vmem:[%s3 + $0x20] sm:$0xff]
    %v121 = vld [vmem:[%s3 + $0x28] sm:$0xff]
    %v122 = vld [vmem:[%s3 + $0x30] sm:$0xff]
    %v123 = vld [vmem:[%s3 + $0x38] sm:$0xff]
    %v124 = vmul.f32 %v111, %v116
    %v125 = vmul.f32 %v114, %v117
    %v126 = vmul.f32 %v111, %v118
    %v127 = vmul.f32 %v114, %v119
    %v128 = vmul.f32 %v111, %v120
    %v129 = vmul.f32 %v114, %v121
    %v130 = vmul.f32 %v111, %v122
    %v131 = vmul.f32 %v114, %v123
    %vm132 = vcmask 523264
    %v133 = vsel %vm132, %v124, 0.0
    %134 = vadd.xlane.f32.xlu0 %v133
    %v135 = vpop.xlane.xlu0 %134
    %v136 = vsel %vm132, %v125, 0.0
    %137 = vadd.xlane.f32.xlu0 %v136
    %v138 = vpop.xlane.xlu0 %137
    %v139 = vsel %vm132, %v126, 0.0
    %140 = vadd.xlane.f32.xlu0 %v139
    %v141 = vpop.xlane.xlu0 %140
    %v142 = vsel %vm132, %v127, 0.0
    %143 = vadd.xlane.f32.xlu0 %v142
    %v144 = vpop.xlane.xlu0 %143
    %v145 = vsel %vm132, %v128, 0.0
    %146 = vadd.xlane.f32.xlu0 %v145
    %v147 = vpop.xlane.xlu0 %146
    %v148 = vsel %vm132, %v129, 0.0
    %149 = vadd.xlane.f32.xlu0 %v148
    %v150 = vpop.xlane.xlu0 %149
    %v151 = vsel %vm132, %v130, 0.0
    %152 = vadd.xlane.f32.xlu0 %v151
    %v153 = vpop.xlane.xlu0 %152
    %v154 = vsel %vm132, %v131, 0.0
    %155 = vadd.xlane.f32.xlu0 %v154
    %v156 = vpop.xlane.xlu0 %155
    %v157 = vld [vmem:[%s4] sm:$0xf]
    %v159 = vsel %vm132, %v157, 0
    %v162 = vsel %vm132, %v111, 0
    %v165 = vsel %vm132, %v114, 0
    %167 = vmatpush.xpose.msra.mxu0 0.0
    %168 = vmatpush.xpose.msra.mxu0 0.0
    %169 = vmatpush.xpose.msra.mxu0 0.0
    %170 = vmatpush.xpose.msra.mxu0 0.0
    %171 = vmatpush.xpose.msra.mxu0 0.0
    %172 = vmatpush.xpose.msra.mxu0 0.0
    %173 = vmatpush.xpose.msra.mxu0 0.0
    %174 = vmatpush.xpose.msra.mxu0 0.0
    %175 = vmatpush.xpose.msra.mxu0 0.0
    %176 = vmatpush.xpose.msra.mxu0 0.0
    %177 = vmatpush.xpose.msra.mxu0 0.0
    %178 = vmatpush.xpose.msra.mxu0 0.0
    %179 = vmatpush.xpose.msra.mxu0 0.0
    %180 = vmatpush.xpose.msra.mxu0 0.0
    %181 = vmatpush.xpose.msra.mxu0 %v165
    %182 = vmatpush.xpose.msra.mxu0 %v162
    %183 = vmatmul.f32.gmra.mxu0 %v159
    %v184 = vpop.f32.mrf.mxu0
    %v185 = vadd.f32 0.0, %v184
    %186 = vdwg.mxu0
    %vm187 = vcmask 31744
    %v189 = vsel %vm187, %v75, 0
    %v192 = vsel %vm187, %v76, 0
    %v195 = vsel %vm187, %v77, 0
    %v198 = vsel %vm187, %v78, 0
    %v201 = vsel %vm187, %v79, 0
    %v204 = vsel %vm187, %v80, 0
    %v207 = vsel %vm187, %v81, 0
    %v210 = vsel %vm187, %v82, 0
    %vm212 = vcmask 1043456
    %v214 = vsel %vm212, %v185, 0
    %216 = vmatpush.msra.mxu0 0.0
    %217 = vmatpush.msra.mxu0 0.0
    %218 = vmatpush.msra.mxu0 0.0
    %219 = vmatpush.msra.mxu0 0.0
    %220 = vmatpush.msra.mxu0 0.0
    %221 = vmatpush.msra.mxu0 0.0
    %222 = vmatpush.msra.mxu0 0.0
    %223 = vmatpush.msra.mxu0 0.0
    %224 = vmatpush.msra.mxu0 0.0
    %225 = vmatpush.msra.mxu0 0.0
    %226 = vmatpush.msra.mxu0 0.0
    %227 = vmatpush.msra.mxu0 0.0
    %228 = vmatpush.msra.mxu0 0.0
    %229 = vmatpush.msra.mxu0 0.0
    %230 = vmatpush.msra.mxu0 0.0
    %231 = vmatpush.msra.mxu0 %v214
    %232 = vmatmul.f32.gmra.mxu0 %v189
    %v233 = vpop.f32.mrf.mxu0
    %v234 = vadd.f32 0.0, %v233
    %235 = vmatmul.f32.gmra.mxu0 %v192
    %v236 = vpop.f32.mrf.mxu0
    %v237 = vadd.f32 0.0, %v236
    %238 = vmatmul.f32.gmra.mxu0 %v195
    %v239 = vpop.f32.mrf.mxu0
    %v240 = vadd.f32 0.0, %v239
    %241 = vmatmul.f32.gmra.mxu0 %v198
    %v242 = vpop.f32.mrf.mxu0
    %v243 = vadd.f32 0.0, %v242
    %244 = vmatmul.f32.gmra.mxu0 %v201
    %v245 = vpop.f32.mrf.mxu0
    %v246 = vadd.f32 0.0, %v245
    %247 = vmatmul.f32.gmra.mxu0 %v204
    %v248 = vpop.f32.mrf.mxu0
    %v249 = vadd.f32 0.0, %v248
    %250 = vmatmul.f32.gmra.mxu0 %v207
    %v251 = vpop.f32.mrf.mxu0
    %v252 = vadd.f32 0.0, %v251
    %253 = vmatmul.f32.gmra.mxu0 %v210
    %v254 = vpop.f32.mrf.mxu0
    %v255 = vadd.f32 0.0, %v254
    %256 = vdwg.mxu0
    %v257 = vadd.f32 %v135, %v234
    %v258 = vadd.f32 %v138, %v237
    %v259 = vadd.f32 %v141, %v240
    %v260 = vadd.f32 %v144, %v243
    %v261 = vadd.f32 %v147, %v246
    %v262 = vadd.f32 %v150, %v249
    %v263 = vadd.f32 %v153, %v252
    %v264 = vadd.f32 %v156, %v255
    %v265 = vld [vmem:[%s5] sm:$0xff]
    %v266 = vld [vmem:[%s5 + $0x8] sm:$0xff]
    %v267 = vld [vmem:[%s5 + $0x10] sm:$0xff]
    %v268 = vld [vmem:[%s5 + $0x18] sm:$0xff]
    %v269 = vld [vmem:[%s5 + $0x20] sm:$0xff]
    %v270 = vld [vmem:[%s5 + $0x28] sm:$0xff]
    %v271 = vld [vmem:[%s5 + $0x30] sm:$0xff]
    %v272 = vld [vmem:[%s5 + $0x38] sm:$0xff]
    %v273 = vadd.f32 %v257, %v265
    %v274 = vadd.f32 %v258, %v266
    %v275 = vadd.f32 %v259, %v267
    %v276 = vadd.f32 %v260, %v268
    %v277 = vadd.f32 %v261, %v269
    %v278 = vadd.f32 %v262, %v270
    %v279 = vadd.f32 %v263, %v271
    %v280 = vadd.f32 %v264, %v272
    %v281 = vmul.f32 %v273, 0.2
    %v282 = vmul.f32 %v274, 0.2
    %v283 = vmul.f32 %v275, 0.2
    %v284 = vmul.f32 %v276, 0.2
    %v285 = vmul.f32 %v277, 0.2
    %v286 = vmul.f32 %v278, 0.2
    %v287 = vmul.f32 %v279, 0.2
    %v288 = vmul.f32 %v280, 0.2
    %v289 = vmax.f32 %v273, %v281
    %v290 = vmax.f32 %v274, %v282
    %v291 = vmax.f32 %v275, %v283
    %v292 = vmax.f32 %v276, %v284
    %v293 = vmax.f32 %v277, %v285
    %v294 = vmax.f32 %v278, %v286
    %v295 = vmax.f32 %v279, %v287
    %v296 = vmax.f32 %v280, %v288
    %vm297 = vcmask 130048
    %v298 = vsel %vm297, %v289, -inf
    %299 = vmax.xlane.f32.xlu0 %v298
    %v300 = vpop.xlane.xlu0 %299
    %v301 = vsel %vm297, %v290, -inf
    %302 = vmax.xlane.f32.xlu0 %v301
    %v303 = vpop.xlane.xlu0 %302
    %v304 = vsel %vm297, %v291, -inf
    %305 = vmax.xlane.f32.xlu0 %v304
    %v306 = vpop.xlane.xlu0 %305
    %v307 = vsel %vm297, %v292, -inf
    %308 = vmax.xlane.f32.xlu0 %v307
    %v309 = vpop.xlane.xlu0 %308
    %v310 = vsel %vm297, %v293, -inf
    %311 = vmax.xlane.f32.xlu0 %v310
    %v312 = vpop.xlane.xlu0 %311
    %v313 = vsel %vm297, %v294, -inf
    %314 = vmax.xlane.f32.xlu0 %v313
    %v315 = vpop.xlane.xlu0 %314
    %v316 = vsel %vm297, %v295, -inf
    %317 = vmax.xlane.f32.xlu0 %v316
    %v318 = vpop.xlane.xlu0 %317
    %v319 = vsel %vm297, %v296, -inf
    %320 = vmax.xlane.f32.xlu0 %v319
    %v321 = vpop.xlane.xlu0 %320
    %v322 = vsub.f32 %v289, %v300
    %v323 = vsub.f32 %v290, %v303
    %v324 = vsub.f32 %v291, %v306
    %v325 = vsub.f32 %v292, %v309
    %v326 = vsub.f32 %v293, %v312
    %v327 = vsub.f32 %v294, %v315
    %v328 = vsub.f32 %v295, %v318
    %v329 = vsub.f32 %v296, %v321
    %v330 = vmul.f32 %v322, 1.442695
    %v331 = vpow.pop %v330
    %v332 = vmul.f32 %v323, 1.442695
    %v333 = vpow.pop %v332
    %v334 = vmul.f32 %v324, 1.442695
    %v335 = vpow.pop %v334
    %v336 = vmul.f32 %v325, 1.442695
    %v337 = vpow.pop %v336
    %v338 = vmul.f32 %v326, 1.442695
    %v339 = vpow.pop %v338
    %v340 = vmul.f32 %v327, 1.442695
    %v341 = vpow.pop %v340
    %v342 = vmul.f32 %v328, 1.442695
    %v343 = vpow.pop %v342
    %v344 = vmul.f32 %v329, 1.442695
    %v345 = vpow.pop %v344
    %v346 = vsel %vm297, %v331, 0.0
    %347 = vadd.xlane.f32.xlu0 %v346
    %v348 = vpop.xlane.xlu0 %347
    %v349 = vsel %vm297, %v333, 0.0
    %350 = vadd.xlane.f32.xlu0 %v349
    %v351 = vpop.xlane.xlu0 %350
    %v352 = vsel %vm297, %v335, 0.0
    %353 = vadd.xlane.f32.xlu0 %v352
    %v354 = vpop.xlane.xlu0 %353
    %v355 = vsel %vm297, %v337, 0.0
    %356 = vadd.xlane.f32.xlu0 %v355
    %v357 = vpop.xlane.xlu0 %356
    %v358 = vsel %vm297, %v339, 0.0
    %359 = vadd.xlane.f32.xlu0 %v358
    %v360 = vpop.xlane.xlu0 %359
    %v361 = vsel %vm297, %v341, 0.0
    %362 = vadd.xlane.f32.xlu0 %v361
    %v363 = vpop.xlane.xlu0 %362
    %v364 = vsel %vm297, %v343, 0.0
    %365 = vadd.xlane.f32.xlu0 %v364
    %v366 = vpop.xlane.xlu0 %365
    %v367 = vsel %vm297, %v345, 0.0
    %368 = vadd.xlane.f32.xlu0 %v367
    %v369 = vpop.xlane.xlu0 %368
    %v370 = vrcp.pop %v348
    %v371 = vrcp.pop %v351
    %v372 = vrcp.pop %v354
    %v373 = vrcp.pop %v357
    %v374 = vrcp.pop %v360
    %v375 = vrcp.pop %v363
    %v376 = vrcp.pop %v366
    %v377 = vrcp.pop %v369
    %v378 = vmul.f32 %v331, %v370
    %v379 = vmul.f32 %v333, %v371
    %v380 = vmul.f32 %v335, %v372
    %v381 = vmul.f32 %v337, %v373
    %v382 = vmul.f32 %v339, %v374
    %v383 = vmul.f32 %v341, %v375
    %v384 = vmul.f32 %v343, %v376
    %v385 = vmul.f32 %v345, %v377
    %v387 = vsel %vm297, %v378, 0
    %v390 = vsel %vm297, %v379, 0
    %392 = vmatpush.msra.mxu0 0.0
    %393 = vmatpush.msra.mxu0 0.0
    %394 = vmatpush.msra.mxu0 0.0
    %395 = vmatpush.msra.mxu0 0.0
    %396 = vmatpush.msra.mxu0 0.0
    %397 = vmatpush.msra.mxu0 0.0
    %398 = vmatpush.msra.mxu0 0.0
    %399 = vmatpush.msra.mxu0 0.0
    %400 = vmatpush.msra.mxu0 0.0
    %401 = vmatpush.msra.mxu0 0.0
    %402 = vmatpush.msra.mxu0 0.0
    %403 = vmatpush.msra.mxu0 0.0
    %404 = vmatpush.msra.mxu0 0.0
    %405 = vmatpush.msra.mxu0 0.0
    %406 = vmatpush.msra.mxu0 %v114
    %407 = vmatpush.msra.mxu0 %v111
    %408 = vmatmul.f32.gmra.mxu0 %v387
    %v409 = vpop.f32.mrf.mxu0
    %v410 = vadd.f32 0.0, %v409
    %411 = vmatmul.f32.gmra.mxu0 %v390
    %v412 = vpop.f32.mrf.mxu0
    %v413 = vadd.f32 0.0, %v412
    %414 = vdwg.mxu0
    %415 = vrot.lane.b32.xlu0 %v111, 112
    %v416 = vpop.permute.xlu0 %415
    %417 = vrot.lane.b32.xlu0 %v114, 112
    %v418 = vpop.permute.xlu0 %417
    %v422 = vsel %vm297, %v380, 0
    %v425 = vsel %vm297, %v381, 0
    %427 = vmatpush.msra.mxu0 0.0
    %428 = vmatpush.msra.mxu0 0.0
    %429 = vmatpush.msra.mxu0 0.0
    %430 = vmatpush.msra.mxu0 0.0
    %431 = vmatpush.msra.mxu0 0.0
    %432 = vmatpush.msra.mxu0 0.0
    %433 = vmatpush.msra.mxu0 0.0
    %434 = vmatpush.msra.mxu0 0.0
    %435 = vmatpush.msra.mxu0 0.0
    %436 = vmatpush.msra.mxu0 0.0
    %437 = vmatpush.msra.mxu0 0.0
    %438 = vmatpush.msra.mxu0 0.0
    %439 = vmatpush.msra.mxu0 0.0
    %440 = vmatpush.msra.mxu0 0.0
    %441 = vmatpush.msra.mxu0 %v418
    %442 = vmatpush.msra.mxu0 %v416
    %443 = vmatmul.f32.gmra.mxu0 %v422
    %v444 = vpop.f32.mrf.mxu0
    %v445 = vadd.f32 0.0, %v444
    %446 = vmatmul.f32.gmra.mxu0 %v425
    %v447 = vpop.f32.mrf.mxu0
    %v448 = vadd.f32 0.0, %v447
    %449 = vdwg.mxu0
    %450 = vrot.lane.b32.xlu0 %v111, 96
    %v451 = vpop.permute.xlu0 %450
    %452 = vrot.lane.b32.xlu0 %v114, 96
    %v453 = vpop.permute.xlu0 %452
    %v457 = vsel %vm297, %v382, 0
    %v460 = vsel %vm297, %v383, 0
    %462 = vmatpush.msra.mxu0 0.0
    %463 = vmatpush.msra.mxu0 0.0
    %464 = vmatpush.msra.mxu0 0.0
    %465 = vmatpush.msra.mxu0 0.0
    %466 = vmatpush.msra.mxu0 0.0
    %467 = vmatpush.msra.mxu0 0.0
    %468 = vmatpush.msra.mxu0 0.0
    %469 = vmatpush.msra.mxu0 0.0
    %470 = vmatpush.msra.mxu0 0.0
    %471 = vmatpush.msra.mxu0 0.0
    %472 = vmatpush.msra.mxu0 0.0
    %473 = vmatpush.msra.mxu0 0.0
    %474 = vmatpush.msra.mxu0 0.0
    %475 = vmatpush.msra.mxu0 0.0
    %476 = vmatpush.msra.mxu0 %v453
    %477 = vmatpush.msra.mxu0 %v451
    %478 = vmatmul.f32.gmra.mxu0 %v457
    %v479 = vpop.f32.mrf.mxu0
    %v480 = vadd.f32 0.0, %v479
    %481 = vmatmul.f32.gmra.mxu0 %v460
    %v482 = vpop.f32.mrf.mxu0
    %v483 = vadd.f32 0.0, %v482
    %484 = vdwg.mxu0
    %485 = vrot.lane.b32.xlu0 %v111, 80
    %v486 = vpop.permute.xlu0 %485
    %487 = vrot.lane.b32.xlu0 %v114, 80
    %v488 = vpop.permute.xlu0 %487
    %v492 = vsel %vm297, %v384, 0
    %v495 = vsel %vm297, %v385, 0
    %497 = vmatpush.msra.mxu0 0.0
    %498 = vmatpush.msra.mxu0 0.0
    %499 = vmatpush.msra.mxu0 0.0
    %500 = vmatpush.msra.mxu0 0.0
    %501 = vmatpush.msra.mxu0 0.0
    %502 = vmatpush.msra.mxu0 0.0
    %503 = vmatpush.msra.mxu0 0.0
    %504 = vmatpush.msra.mxu0 0.0
    %505 = vmatpush.msra.mxu0 0.0
    %506 = vmatpush.msra.mxu0 0.0
    %507 = vmatpush.msra.mxu0 0.0
    %508 = vmatpush.msra.mxu0 0.0
    %509 = vmatpush.msra.mxu0 0.0
    %510 = vmatpush.msra.mxu0 0.0
    %511 = vmatpush.msra.mxu0 %v488
    %512 = vmatpush.msra.mxu0 %v486
    %513 = vmatmul.f32.gmra.mxu0 %v492
    %v514 = vpop.f32.mrf.mxu0
    %v515 = vadd.f32 0.0, %v514
    %516 = vmatmul.f32.gmra.mxu0 %v495
    %v517 = vpop.f32.mrf.mxu0
    %v518 = vadd.f32 0.0, %v517
    %519 = vdwg.mxu0
    %522 = vrot.lane.b32.xlu0 %v445, 16
    %v523 = vpop.permute.xlu0 %522
    %524 = vrot.lane.b32.xlu0 %v448, 16
    %v525 = vpop.permute.xlu0 %524
    %530 = vrot.lane.b32.xlu0 %v480, 32
    %v531 = vpop.permute.xlu0 %530
    %532 = vrot.lane.b32.xlu0 %v483, 32
    %v533 = vpop.permute.xlu0 %532
    %538 = vrot.lane.b32.xlu0 %v515, 48
    %v539 = vpop.permute.xlu0 %538
    %540 = vrot.lane.b32.xlu0 %v518, 48
    %v541 = vpop.permute.xlu0 %540
    %v544 = vsel %vm297, %v410, %v523
    %v545 = vsel %vm297, %v413, %v525
    %vm546 = vcmask 261120
    %v547 = vsel %vm546, %v544, %v531
    %v548 = vsel %vm546, %v545, %v533
    %vm549 = vcmask 392192
    %v550 = vsel %vm549, %v547, %v539
    %v551 = vsel %vm549, %v548, %v541
    %v552 = vld [vmem:[%s6] sm:$0x1]
    %v554 = vperm.slane %v552, 0
    %v556 = vadd.f32 %v550, %v554
    %v557 = vadd.f32 %v551, %v554
    %v558 = vmax.f32 %v556, 0.0
    %v559 = vmax.f32 %v557, 0.0
    %v560 = vld [vmem:[%s7] sm:$0xff]
    %v561 = vld [vmem:[%s7 + $0x8] sm:$0xff]
    %v562 = vld [vmem:[%s7 + $0x10] sm:$0xff]
    %v563 = vld [vmem:[%s7 + $0x18] sm:$0xff]
    %v564 = vld [vmem:[%s7 + $0x20] sm:$0xff]
    %v565 = vld [vmem:[%s7 + $0x28] sm:$0xff]
    %v566 = vld [vmem:[%s7 + $0x30] sm:$0xff]
    %v567 = vld [vmem:[%s7 + $0x38] sm:$0xff]
    %v569 = vsel %vm132, %v558, 0
    %v572 = vsel %vm132, %v559, 0
    %574 = vmatpush.msra.mxu0 0.0
    %575 = vmatpush.msra.mxu0 0.0
    %576 = vmatpush.msra.mxu0 0.0
    %577 = vmatpush.msra.mxu0 0.0
    %578 = vmatpush.msra.mxu0 0.0
    %579 = vmatpush.msra.mxu0 0.0
    %580 = vmatpush.msra.mxu0 0.0
    %581 = vmatpush.msra.mxu0 0.0
    %582 = vmatpush.msra.mxu0 %v567
    %583 = vmatpush.msra.mxu0 %v566
    %584 = vmatpush.msra.mxu0 %v565
    %585 = vmatpush.msra.mxu0 %v564
    %586 = vmatpush.msra.mxu0 %v563
    %587 = vmatpush.msra.mxu0 %v562
    %588 = vmatpush.msra.mxu0 %v561
    %589 = vmatpush.msra.mxu0 %v560
    %590 = vmatmul.f32.gmra.mxu0 %v569
    %v591 = vpop.f32.mrf.mxu0
    %v592 = vadd.f32 0.0, %v591
    %593 = vmatmul.f32.gmra.mxu0 %v572
    %v594 = vpop.f32.mrf.mxu0
    %v595 = vadd.f32 0.0, %v594
    %596 = vdwg.mxu0
    %v597 = vld [vmem:[%s8] sm:$0xff]
    %v598 = vld [vmem:[%s8 + $0x8] sm:$0xff]
    %v599 = vld [vmem:[%s8 + $0x10] sm:$0xff]
    %v600 = vld [vmem:[%s8 + $0x18] sm:$0xff]
    %v601 = vld [vmem:[%s8 + $0x20] sm:$0xff]
    %v602 = vld [vmem:[%s8 + $0x28] sm:$0xff]
    %v603 = vld [vmem:[%s8 + $0x30] sm:$0xff]
    %v604 = vld [vmem:[%s8 + $0x38] sm:$0xff]
    %v605 = vmul.f32 %v592, %v597
    %v606 = vmul.f32 %v595, %v598
    %v607 = vmul.f32 %v592, %v599
    %v608 = vmul.f32 %v595, %v600
    %v609 = vmul.f32 %v592, %v601
    %v610 = vmul.f32 %v595, %v602
    %v611 = vmul.f32 %v592, %v603
    %v612 = vmul.f32 %v595, %v604
    %v613 = vsel %vm132, %v605, 0.0
    %614 = vadd.xlane.f32.xlu0 %v613
    %v615 = vpop.xlane.xlu0 %614
    %v616 = vsel %vm132, %v606, 0.0
    %617 = vadd.xlane.f32.xlu0 %v616
    %v618 = vpop.xlane.xlu0 %617
    %v619 = vsel %vm132, %v607, 0.0
    %620 = vadd.xlane.f32.xlu0 %v619
    %v621 = vpop.xlane.xlu0 %620
    %v622 = vsel %vm132, %v608, 0.0
    %623 = vadd.xlane.f32.xlu0 %v622
    %v624 = vpop.xlane.xlu0 %623
    %v625 = vsel %vm132, %v609, 0.0
    %626 = vadd.xlane.f32.xlu0 %v625
    %v627 = vpop.xlane.xlu0 %626
    %v628 = vsel %vm132, %v610, 0.0
    %629 = vadd.xlane.f32.xlu0 %v628
    %v630 = vpop.xlane.xlu0 %629
    %v631 = vsel %vm132, %v611, 0.0
    %632 = vadd.xlane.f32.xlu0 %v631
    %v633 = vpop.xlane.xlu0 %632
    %v634 = vsel %vm132, %v612, 0.0
    %635 = vadd.xlane.f32.xlu0 %v634
    %v636 = vpop.xlane.xlu0 %635
    %v637 = vld [vmem:[%s9] sm:$0xf]
    %v639 = vsel %vm132, %v637, 0
    %v642 = vsel %vm132, %v592, 0
    %v645 = vsel %vm132, %v595, 0
    %647 = vmatpush.xpose.msra.mxu0 0.0
    %648 = vmatpush.xpose.msra.mxu0 0.0
    %649 = vmatpush.xpose.msra.mxu0 0.0
    %650 = vmatpush.xpose.msra.mxu0 0.0
    %651 = vmatpush.xpose.msra.mxu0 0.0
    %652 = vmatpush.xpose.msra.mxu0 0.0
    %653 = vmatpush.xpose.msra.mxu0 0.0
    %654 = vmatpush.xpose.msra.mxu0 0.0
    %655 = vmatpush.xpose.msra.mxu0 0.0
    %656 = vmatpush.xpose.msra.mxu0 0.0
    %657 = vmatpush.xpose.msra.mxu0 0.0
    %658 = vmatpush.xpose.msra.mxu0 0.0
    %659 = vmatpush.xpose.msra.mxu0 0.0
    %660 = vmatpush.xpose.msra.mxu0 0.0
    %661 = vmatpush.xpose.msra.mxu0 %v645
    %662 = vmatpush.xpose.msra.mxu0 %v642
    %663 = vmatmul.f32.gmra.mxu0 %v639
    %v664 = vpop.f32.mrf.mxu0
    %v665 = vadd.f32 0.0, %v664
    %666 = vdwg.mxu0
    %v668 = vsel %vm212, %v665, 0
    %670 = vmatpush.msra.mxu0 0.0
    %671 = vmatpush.msra.mxu0 0.0
    %672 = vmatpush.msra.mxu0 0.0
    %673 = vmatpush.msra.mxu0 0.0
    %674 = vmatpush.msra.mxu0 0.0
    %675 = vmatpush.msra.mxu0 0.0
    %676 = vmatpush.msra.mxu0 0.0
    %677 = vmatpush.msra.mxu0 0.0
    %678 = vmatpush.msra.mxu0 0.0
    %679 = vmatpush.msra.mxu0 0.0
    %680 = vmatpush.msra.mxu0 0.0
    %681 = vmatpush.msra.mxu0 0.0
    %682 = vmatpush.msra.mxu0 0.0
    %683 = vmatpush.msra.mxu0 0.0
    %684 = vmatpush.msra.mxu0 0.0
    %685 = vmatpush.msra.mxu0 %v668
    %686 = vmatmul.f32.gmra.mxu0 %v189
    %v687 = vpop.f32.mrf.mxu0
    %v688 = vadd.f32 0.0, %v687
    %689 = vmatmul.f32.gmra.mxu0 %v192
    %v690 = vpop.f32.mrf.mxu0
    %v691 = vadd.f32 0.0, %v690
    %692 = vmatmul.f32.gmra.mxu0 %v195
    %v693 = vpop.f32.mrf.mxu0
    %v694 = vadd.f32 0.0, %v693
    %695 = vmatmul.f32.gmra.mxu0 %v198
    %v696 = vpop.f32.mrf.mxu0
    %v697 = vadd.f32 0.0, %v696
    %698 = vmatmul.f32.gmra.mxu0 %v201
    %v699 = vpop.f32.mrf.mxu0
    %v700 = vadd.f32 0.0, %v699
    %701 = vmatmul.f32.gmra.mxu0 %v204
    %v702 = vpop.f32.mrf.mxu0
    %v703 = vadd.f32 0.0, %v702
    %704 = vmatmul.f32.gmra.mxu0 %v207
    %v705 = vpop.f32.mrf.mxu0
    %v706 = vadd.f32 0.0, %v705
    %707 = vmatmul.f32.gmra.mxu0 %v210
    %v708 = vpop.f32.mrf.mxu0
    %v709 = vadd.f32 0.0, %v708
    %710 = vdwg.mxu0
    %v711 = vadd.f32 %v615, %v688
    %v712 = vadd.f32 %v618, %v691
    %v713 = vadd.f32 %v621, %v694
    %v714 = vadd.f32 %v624, %v697
    %v715 = vadd.f32 %v627, %v700
    %v716 = vadd.f32 %v630, %v703
    %v717 = vadd.f32 %v633, %v706
    %v718 = vadd.f32 %v636, %v709
    %v719 = vld [vmem:[%s10] sm:$0xff]
    %v720 = vld [vmem:[%s10 + $0x8] sm:$0xff]
    %v721 = vld [vmem:[%s10 + $0x10] sm:$0xff]
    %v722 = vld [vmem:[%s10 + $0x18] sm:$0xff]
    %v723 = vld [vmem:[%s10 + $0x20] sm:$0xff]
    %v724 = vld [vmem:[%s10 + $0x28] sm:$0xff]
    %v725 = vld [vmem:[%s10 + $0x30] sm:$0xff]
    %v726 = vld [vmem:[%s10 + $0x38] sm:$0xff]
    %v727 = vadd.f32 %v711, %v719
    %v728 = vadd.f32 %v712, %v720
    %v729 = vadd.f32 %v713, %v721
    %v730 = vadd.f32 %v714, %v722
    %v731 = vadd.f32 %v715, %v723
    %v732 = vadd.f32 %v716, %v724
    %v733 = vadd.f32 %v717, %v725
    %v734 = vadd.f32 %v718, %v726
    %v735 = vmul.f32 %v727, 0.2
    %v736 = vmul.f32 %v728, 0.2
    %v737 = vmul.f32 %v729, 0.2
    %v738 = vmul.f32 %v730, 0.2
    %v739 = vmul.f32 %v731, 0.2
    %v740 = vmul.f32 %v732, 0.2
    %v741 = vmul.f32 %v733, 0.2
    %v742 = vmul.f32 %v734, 0.2
    %v743 = vmax.f32 %v727, %v735
    %v744 = vmax.f32 %v728, %v736
    %v745 = vmax.f32 %v729, %v737
    %v746 = vmax.f32 %v730, %v738
    %v747 = vmax.f32 %v731, %v739
    %v748 = vmax.f32 %v732, %v740
    %v749 = vmax.f32 %v733, %v741
    %v750 = vmax.f32 %v734, %v742
    %v751 = vsel %vm297, %v743, -inf
    %752 = vmax.xlane.f32.xlu0 %v751
    %v753 = vpop.xlane.xlu0 %752
    %v754 = vsel %vm297, %v744, -inf
    %755 = vmax.xlane.f32.xlu0 %v754
    %v756 = vpop.xlane.xlu0 %755
    %v757 = vsel %vm297, %v745, -inf
    %758 = vmax.xlane.f32.xlu0 %v757
    %v759 = vpop.xlane.xlu0 %758
    %v760 = vsel %vm297, %v746, -inf
    %761 = vmax.xlane.f32.xlu0 %v760
    %v762 = vpop.xlane.xlu0 %761
    %v763 = vsel %vm297, %v747, -inf
    %764 = vmax.xlane.f32.xlu0 %v763
    %v765 = vpop.xlane.xlu0 %764
    %v766 = vsel %vm297, %v748, -inf
    %767 = vmax.xlane.f32.xlu0 %v766
    %v768 = vpop.xlane.xlu0 %767
    %v769 = vsel %vm297, %v749, -inf
    %770 = vmax.xlane.f32.xlu0 %v769
    %v771 = vpop.xlane.xlu0 %770
    %v772 = vsel %vm297, %v750, -inf
    %773 = vmax.xlane.f32.xlu0 %v772
    %v774 = vpop.xlane.xlu0 %773
    %v775 = vsub.f32 %v743, %v753
    %v776 = vsub.f32 %v744, %v756
    %v777 = vsub.f32 %v745, %v759
    %v778 = vsub.f32 %v746, %v762
    %v779 = vsub.f32 %v747, %v765
    %v780 = vsub.f32 %v748, %v768
    %v781 = vsub.f32 %v749, %v771
    %v782 = vsub.f32 %v750, %v774
    %v783 = vmul.f32 %v775, 1.442695
    %v784 = vpow.pop %v783
    %v785 = vmul.f32 %v776, 1.442695
    %v786 = vpow.pop %v785
    %v787 = vmul.f32 %v777, 1.442695
    %v788 = vpow.pop %v787
    %v789 = vmul.f32 %v778, 1.442695
    %v790 = vpow.pop %v789
    %v791 = vmul.f32 %v779, 1.442695
    %v792 = vpow.pop %v791
    %v793 = vmul.f32 %v780, 1.442695
    %v794 = vpow.pop %v793
    %v795 = vmul.f32 %v781, 1.442695
    %v796 = vpow.pop %v795
    %v797 = vmul.f32 %v782, 1.442695
    %v798 = vpow.pop %v797
    %v799 = vsel %vm297, %v784, 0.0
    %800 = vadd.xlane.f32.xlu0 %v799
    %v801 = vpop.xlane.xlu0 %800
    %v802 = vsel %vm297, %v786, 0.0
    %803 = vadd.xlane.f32.xlu0 %v802
    %v804 = vpop.xlane.xlu0 %803
    %v805 = vsel %vm297, %v788, 0.0
    %806 = vadd.xlane.f32.xlu0 %v805
    %v807 = vpop.xlane.xlu0 %806
    %v808 = vsel %vm297, %v790, 0.0
    %809 = vadd.xlane.f32.xlu0 %v808
    %v810 = vpop.xlane.xlu0 %809
    %v811 = vsel %vm297, %v792, 0.0
    %812 = vadd.xlane.f32.xlu0 %v811
    %v813 = vpop.xlane.xlu0 %812
    %v814 = vsel %vm297, %v794, 0.0
    %815 = vadd.xlane.f32.xlu0 %v814
    %v816 = vpop.xlane.xlu0 %815
    %v817 = vsel %vm297, %v796, 0.0
    %818 = vadd.xlane.f32.xlu0 %v817
    %v819 = vpop.xlane.xlu0 %818
    %v820 = vsel %vm297, %v798, 0.0
    %821 = vadd.xlane.f32.xlu0 %v820
    %v822 = vpop.xlane.xlu0 %821
    %v823 = vrcp.pop %v801
    %v824 = vrcp.pop %v804
    %v825 = vrcp.pop %v807
    %v826 = vrcp.pop %v810
    %v827 = vrcp.pop %v813
    %v828 = vrcp.pop %v816
    %v829 = vrcp.pop %v819
    %v830 = vrcp.pop %v822
    %v831 = vmul.f32 %v784, %v823
    %v832 = vmul.f32 %v786, %v824
    %v833 = vmul.f32 %v788, %v825
    %v834 = vmul.f32 %v790, %v826
    %v835 = vmul.f32 %v792, %v827
    %v836 = vmul.f32 %v794, %v828
    %v837 = vmul.f32 %v796, %v829
    %v838 = vmul.f32 %v798, %v830
    %v840 = vsel %vm297, %v831, 0
    %v843 = vsel %vm297, %v832, 0
    %845 = vmatpush.msra.mxu0 0.0
    %846 = vmatpush.msra.mxu0 0.0
    %847 = vmatpush.msra.mxu0 0.0
    %848 = vmatpush.msra.mxu0 0.0
    %849 = vmatpush.msra.mxu0 0.0
    %850 = vmatpush.msra.mxu0 0.0
    %851 = vmatpush.msra.mxu0 0.0
    %852 = vmatpush.msra.mxu0 0.0
    %853 = vmatpush.msra.mxu0 0.0
    %854 = vmatpush.msra.mxu0 0.0
    %855 = vmatpush.msra.mxu0 0.0
    %856 = vmatpush.msra.mxu0 0.0
    %857 = vmatpush.msra.mxu0 0.0
    %858 = vmatpush.msra.mxu0 0.0
    %859 = vmatpush.msra.mxu0 %v595
    %860 = vmatpush.msra.mxu0 %v592
    %861 = vmatmul.f32.gmra.mxu0 %v840
    %v862 = vpop.f32.mrf.mxu0
    %v863 = vadd.f32 0.0, %v862
    %864 = vmatmul.f32.gmra.mxu0 %v843
    %v865 = vpop.f32.mrf.mxu0
    %v866 = vadd.f32 0.0, %v865
    %867 = vdwg.mxu0
    %868 = vrot.lane.b32.xlu0 %v592, 112
    %v869 = vpop.permute.xlu0 %868
    %870 = vrot.lane.b32.xlu0 %v595, 112
    %v871 = vpop.permute.xlu0 %870
    %v875 = vsel %vm297, %v833, 0
    %v878 = vsel %vm297, %v834, 0
    %880 = vmatpush.msra.mxu0 0.0
    %881 = vmatpush.msra.mxu0 0.0
    %882 = vmatpush.msra.mxu0 0.0
    %883 = vmatpush.msra.mxu0 0.0
    %884 = vmatpush.msra.mxu0 0.0
    %885 = vmatpush.msra.mxu0 0.0
    %886 = vmatpush.msra.mxu0 0.0
    %887 = vmatpush.msra.mxu0 0.0
    %888 = vmatpush.msra.mxu0 0.0
    %889 = vmatpush.msra.mxu0 0.0
    %890 = vmatpush.msra.mxu0 0.0
    %891 = vmatpush.msra.mxu0 0.0
    %892 = vmatpush.msra.mxu0 0.0
    %893 = vmatpush.msra.mxu0 0.0
    %894 = vmatpush.msra.mxu0 %v871
    %895 = vmatpush.msra.mxu0 %v869
    %896 = vmatmul.f32.gmra.mxu0 %v875
    %v897 = vpop.f32.mrf.mxu0
    %v898 = vadd.f32 0.0, %v897
    %899 = vmatmul.f32.gmra.mxu0 %v878
    %v900 = vpop.f32.mrf.mxu0
    %v901 = vadd.f32 0.0, %v900
    %902 = vdwg.mxu0
    %903 = vrot.lane.b32.xlu0 %v592, 96
    %v904 = vpop.permute.xlu0 %903
    %905 = vrot.lane.b32.xlu0 %v595, 96
    %v906 = vpop.permute.xlu0 %905
    %v910 = vsel %vm297, %v835, 0
    %v913 = vsel %vm297, %v836, 0
    %915 = vmatpush.msra.mxu0 0.0
    %916 = vmatpush.msra.mxu0 0.0
    %917 = vmatpush.msra.mxu0 0.0
    %918 = vmatpush.msra.mxu0 0.0
    %919 = vmatpush.msra.mxu0 0.0
    %920 = vmatpush.msra.mxu0 0.0
    %921 = vmatpush.msra.mxu0 0.0
    %922 = vmatpush.msra.mxu0 0.0
    %923 = vmatpush.msra.mxu0 0.0
    %924 = vmatpush.msra.mxu0 0.0
    %925 = vmatpush.msra.mxu0 0.0
    %926 = vmatpush.msra.mxu0 0.0
    %927 = vmatpush.msra.mxu0 0.0
    %928 = vmatpush.msra.mxu0 0.0
    %929 = vmatpush.msra.mxu0 %v906
    %930 = vmatpush.msra.mxu0 %v904
    %931 = vmatmul.f32.gmra.mxu0 %v910
    %v932 = vpop.f32.mrf.mxu0
    %v933 = vadd.f32 0.0, %v932
    %934 = vmatmul.f32.gmra.mxu0 %v913
    %v935 = vpop.f32.mrf.mxu0
    %v936 = vadd.f32 0.0, %v935
    %937 = vdwg.mxu0
    %938 = vrot.lane.b32.xlu0 %v592, 80
    %v939 = vpop.permute.xlu0 %938
    %940 = vrot.lane.b32.xlu0 %v595, 80
    %v941 = vpop.permute.xlu0 %940
    %v945 = vsel %vm297, %v837, 0
    %v948 = vsel %vm297, %v838, 0
    %950 = vmatpush.msra.mxu0 0.0
    %951 = vmatpush.msra.mxu0 0.0
    %952 = vmatpush.msra.mxu0 0.0
    %953 = vmatpush.msra.mxu0 0.0
    %954 = vmatpush.msra.mxu0 0.0
    %955 = vmatpush.msra.mxu0 0.0
    %956 = vmatpush.msra.mxu0 0.0
    %957 = vmatpush.msra.mxu0 0.0
    %958 = vmatpush.msra.mxu0 0.0
    %959 = vmatpush.msra.mxu0 0.0
    %960 = vmatpush.msra.mxu0 0.0
    %961 = vmatpush.msra.mxu0 0.0
    %962 = vmatpush.msra.mxu0 0.0
    %963 = vmatpush.msra.mxu0 0.0
    %964 = vmatpush.msra.mxu0 %v941
    %965 = vmatpush.msra.mxu0 %v939
    %966 = vmatmul.f32.gmra.mxu0 %v945
    %v967 = vpop.f32.mrf.mxu0
    %v968 = vadd.f32 0.0, %v967
    %969 = vmatmul.f32.gmra.mxu0 %v948
    %v970 = vpop.f32.mrf.mxu0
    %v971 = vadd.f32 0.0, %v970
    %972 = vdwg.mxu0
    %975 = vrot.lane.b32.xlu0 %v898, 16
    %v976 = vpop.permute.xlu0 %975
    %977 = vrot.lane.b32.xlu0 %v901, 16
    %v978 = vpop.permute.xlu0 %977
    %983 = vrot.lane.b32.xlu0 %v933, 32
    %v984 = vpop.permute.xlu0 %983
    %985 = vrot.lane.b32.xlu0 %v936, 32
    %v986 = vpop.permute.xlu0 %985
    %991 = vrot.lane.b32.xlu0 %v968, 48
    %v992 = vpop.permute.xlu0 %991
    %993 = vrot.lane.b32.xlu0 %v971, 48
    %v994 = vpop.permute.xlu0 %993
    %v997 = vsel %vm297, %v863, %v976
    %v998 = vsel %vm297, %v866, %v978
    %v999 = vsel %vm546, %v997, %v984
    %v1000 = vsel %vm546, %v998, %v986
    %v1001 = vsel %vm549, %v999, %v992
    %v1002 = vsel %vm549, %v1000, %v994
    %v1003 = vld [vmem:[%s11] sm:$0x1]
    %v1005 = vperm.slane %v1003, 0
    %v1007 = vadd.f32 %v1001, %v1005
    %v1008 = vadd.f32 %v1002, %v1005
    %v1009 = vmax.f32 %v1007, 0.0
    %v1010 = vmax.f32 %v1008, 0.0
    %v1011 = vld [vmem:[%s12] sm:$0xff]
    %v1012 = vld [vmem:[%s12 + $0x8] sm:$0xff]
    %v1013 = vld [vmem:[%s12 + $0x10] sm:$0xff]
    %v1014 = vld [vmem:[%s12 + $0x18] sm:$0xff]
    %v1015 = vld [vmem:[%s12 + $0x20] sm:$0xff]
    %v1016 = vld [vmem:[%s12 + $0x28] sm:$0xff]
    %v1017 = vld [vmem:[%s12 + $0x30] sm:$0xff]
    %v1018 = vld [vmem:[%s12 + $0x38] sm:$0xff]
    %v1020 = vsel %vm132, %v1009, 0
    %v1023 = vsel %vm132, %v1010, 0
    %1025 = vmatpush.msra.mxu0 0.0
    %1026 = vmatpush.msra.mxu0 0.0
    %1027 = vmatpush.msra.mxu0 0.0
    %1028 = vmatpush.msra.mxu0 0.0
    %1029 = vmatpush.msra.mxu0 0.0
    %1030 = vmatpush.msra.mxu0 0.0
    %1031 = vmatpush.msra.mxu0 0.0
    %1032 = vmatpush.msra.mxu0 0.0
    %1033 = vmatpush.msra.mxu0 %v1018
    %1034 = vmatpush.msra.mxu0 %v1017
    %1035 = vmatpush.msra.mxu0 %v1016
    %1036 = vmatpush.msra.mxu0 %v1015
    %1037 = vmatpush.msra.mxu0 %v1014
    %1038 = vmatpush.msra.mxu0 %v1013
    %1039 = vmatpush.msra.mxu0 %v1012
    %1040 = vmatpush.msra.mxu0 %v1011
    %1041 = vmatmul.f32.gmra.mxu0 %v1020
    %v1042 = vpop.f32.mrf.mxu0
    %v1043 = vadd.f32 0.0, %v1042
    %1044 = vmatmul.f32.gmra.mxu0 %v1023
    %v1045 = vpop.f32.mrf.mxu0
    %v1046 = vadd.f32 0.0, %v1045
    %1047 = vdwg.mxu0
    %v1048 = vld [vmem:[%s13] sm:$0xff]
    %v1049 = vld [vmem:[%s13 + $0x8] sm:$0xff]
    %v1050 = vld [vmem:[%s13 + $0x10] sm:$0xff]
    %v1051 = vld [vmem:[%s13 + $0x18] sm:$0xff]
    %v1052 = vld [vmem:[%s13 + $0x20] sm:$0xff]
    %v1053 = vld [vmem:[%s13 + $0x28] sm:$0xff]
    %v1054 = vld [vmem:[%s13 + $0x30] sm:$0xff]
    %v1055 = vld [vmem:[%s13 + $0x38] sm:$0xff]
    %v1056 = vmul.f32 %v1043, %v1048
    %v1057 = vmul.f32 %v1046, %v1049
    %v1058 = vmul.f32 %v1043, %v1050
    %v1059 = vmul.f32 %v1046, %v1051
    %v1060 = vmul.f32 %v1043, %v1052
    %v1061 = vmul.f32 %v1046, %v1053
    %v1062 = vmul.f32 %v1043, %v1054
    %v1063 = vmul.f32 %v1046, %v1055
    %v1064 = vsel %vm132, %v1056, 0.0
    %1065 = vadd.xlane.f32.xlu0 %v1064
    %v1066 = vpop.xlane.xlu0 %1065
    %v1067 = vsel %vm132, %v1057, 0.0
    %1068 = vadd.xlane.f32.xlu0 %v1067
    %v1069 = vpop.xlane.xlu0 %1068
    %v1070 = vsel %vm132, %v1058, 0.0
    %1071 = vadd.xlane.f32.xlu0 %v1070
    %v1072 = vpop.xlane.xlu0 %1071
    %v1073 = vsel %vm132, %v1059, 0.0
    %1074 = vadd.xlane.f32.xlu0 %v1073
    %v1075 = vpop.xlane.xlu0 %1074
    %v1076 = vsel %vm132, %v1060, 0.0
    %1077 = vadd.xlane.f32.xlu0 %v1076
    %v1078 = vpop.xlane.xlu0 %1077
    %v1079 = vsel %vm132, %v1061, 0.0
    %1080 = vadd.xlane.f32.xlu0 %v1079
    %v1081 = vpop.xlane.xlu0 %1080
    %v1082 = vsel %vm132, %v1062, 0.0
    %1083 = vadd.xlane.f32.xlu0 %v1082
    %v1084 = vpop.xlane.xlu0 %1083
    %v1085 = vsel %vm132, %v1063, 0.0
    %1086 = vadd.xlane.f32.xlu0 %v1085
    %v1087 = vpop.xlane.xlu0 %1086
    %v1088 = vld [vmem:[%s14] sm:$0xf]
    %v1090 = vsel %vm132, %v1088, 0
    %v1093 = vsel %vm132, %v1043, 0
    %v1096 = vsel %vm132, %v1046, 0
    %1098 = vmatpush.xpose.msra.mxu0 0.0
    %1099 = vmatpush.xpose.msra.mxu0 0.0
    %1100 = vmatpush.xpose.msra.mxu0 0.0
    %1101 = vmatpush.xpose.msra.mxu0 0.0
    %1102 = vmatpush.xpose.msra.mxu0 0.0
    %1103 = vmatpush.xpose.msra.mxu0 0.0
    %1104 = vmatpush.xpose.msra.mxu0 0.0
    %1105 = vmatpush.xpose.msra.mxu0 0.0
    %1106 = vmatpush.xpose.msra.mxu0 0.0
    %1107 = vmatpush.xpose.msra.mxu0 0.0
    %1108 = vmatpush.xpose.msra.mxu0 0.0
    %1109 = vmatpush.xpose.msra.mxu0 0.0
    %1110 = vmatpush.xpose.msra.mxu0 0.0
    %1111 = vmatpush.xpose.msra.mxu0 0.0
    %1112 = vmatpush.xpose.msra.mxu0 %v1096
    %1113 = vmatpush.xpose.msra.mxu0 %v1093
    %1114 = vmatmul.f32.gmra.mxu0 %v1090
    %v1115 = vpop.f32.mrf.mxu0
    %v1116 = vadd.f32 0.0, %v1115
    %1117 = vdwg.mxu0
    %v1119 = vsel %vm212, %v1116, 0
    %1121 = vmatpush.msra.mxu0 0.0
    %1122 = vmatpush.msra.mxu0 0.0
    %1123 = vmatpush.msra.mxu0 0.0
    %1124 = vmatpush.msra.mxu0 0.0
    %1125 = vmatpush.msra.mxu0 0.0
    %1126 = vmatpush.msra.mxu0 0.0
    %1127 = vmatpush.msra.mxu0 0.0
    %1128 = vmatpush.msra.mxu0 0.0
    %1129 = vmatpush.msra.mxu0 0.0
    %1130 = vmatpush.msra.mxu0 0.0
    %1131 = vmatpush.msra.mxu0 0.0
    %1132 = vmatpush.msra.mxu0 0.0
    %1133 = vmatpush.msra.mxu0 0.0
    %1134 = vmatpush.msra.mxu0 0.0
    %1135 = vmatpush.msra.mxu0 0.0
    %1136 = vmatpush.msra.mxu0 %v1119
    %1137 = vmatmul.f32.gmra.mxu0 %v189
    %v1138 = vpop.f32.mrf.mxu0
    %v1139 = vadd.f32 0.0, %v1138
    %1140 = vmatmul.f32.gmra.mxu0 %v192
    %v1141 = vpop.f32.mrf.mxu0
    %v1142 = vadd.f32 0.0, %v1141
    %1143 = vmatmul.f32.gmra.mxu0 %v195
    %v1144 = vpop.f32.mrf.mxu0
    %v1145 = vadd.f32 0.0, %v1144
    %1146 = vmatmul.f32.gmra.mxu0 %v198
    %v1147 = vpop.f32.mrf.mxu0
    %v1148 = vadd.f32 0.0, %v1147
    %1149 = vmatmul.f32.gmra.mxu0 %v201
    %v1150 = vpop.f32.mrf.mxu0
    %v1151 = vadd.f32 0.0, %v1150
    %1152 = vmatmul.f32.gmra.mxu0 %v204
    %v1153 = vpop.f32.mrf.mxu0
    %v1154 = vadd.f32 0.0, %v1153
    %1155 = vmatmul.f32.gmra.mxu0 %v207
    %v1156 = vpop.f32.mrf.mxu0
    %v1157 = vadd.f32 0.0, %v1156
    %1158 = vmatmul.f32.gmra.mxu0 %v210
    %v1159 = vpop.f32.mrf.mxu0
    %v1160 = vadd.f32 0.0, %v1159
    %1161 = vdwg.mxu0
    %v1162 = vadd.f32 %v1066, %v1139
    %v1163 = vadd.f32 %v1069, %v1142
    %v1164 = vadd.f32 %v1072, %v1145
    %v1165 = vadd.f32 %v1075, %v1148
    %v1166 = vadd.f32 %v1078, %v1151
    %v1167 = vadd.f32 %v1081, %v1154
    %v1168 = vadd.f32 %v1084, %v1157
    %v1169 = vadd.f32 %v1087, %v1160
    %v1170 = vld [vmem:[%s15] sm:$0xff]
    %v1171 = vld [vmem:[%s15 + $0x8] sm:$0xff]
    %v1172 = vld [vmem:[%s15 + $0x10] sm:$0xff]
    %v1173 = vld [vmem:[%s15 + $0x18] sm:$0xff]
    %v1174 = vld [vmem:[%s15 + $0x20] sm:$0xff]
    %v1175 = vld [vmem:[%s15 + $0x28] sm:$0xff]
    %v1176 = vld [vmem:[%s15 + $0x30] sm:$0xff]
    %v1177 = vld [vmem:[%s15 + $0x38] sm:$0xff]
    %v1178 = vadd.f32 %v1162, %v1170
    %v1179 = vadd.f32 %v1163, %v1171
    %v1180 = vadd.f32 %v1164, %v1172
    %v1181 = vadd.f32 %v1165, %v1173
    %v1182 = vadd.f32 %v1166, %v1174
    %v1183 = vadd.f32 %v1167, %v1175
    %v1184 = vadd.f32 %v1168, %v1176
    %v1185 = vadd.f32 %v1169, %v1177
    %v1186 = vmul.f32 %v1178, 0.2
    %v1187 = vmul.f32 %v1179, 0.2
    %v1188 = vmul.f32 %v1180, 0.2
    %v1189 = vmul.f32 %v1181, 0.2
    %v1190 = vmul.f32 %v1182, 0.2
    %v1191 = vmul.f32 %v1183, 0.2
    %v1192 = vmul.f32 %v1184, 0.2
    %v1193 = vmul.f32 %v1185, 0.2
    %v1194 = vmax.f32 %v1178, %v1186
    %v1195 = vmax.f32 %v1179, %v1187
    %v1196 = vmax.f32 %v1180, %v1188
    %v1197 = vmax.f32 %v1181, %v1189
    %v1198 = vmax.f32 %v1182, %v1190
    %v1199 = vmax.f32 %v1183, %v1191
    %v1200 = vmax.f32 %v1184, %v1192
    %v1201 = vmax.f32 %v1185, %v1193
    %v1202 = vsel %vm297, %v1194, -inf
    %1203 = vmax.xlane.f32.xlu0 %v1202
    %v1204 = vpop.xlane.xlu0 %1203
    %v1205 = vsel %vm297, %v1195, -inf
    %1206 = vmax.xlane.f32.xlu0 %v1205
    %v1207 = vpop.xlane.xlu0 %1206
    %v1208 = vsel %vm297, %v1196, -inf
    %1209 = vmax.xlane.f32.xlu0 %v1208
    %v1210 = vpop.xlane.xlu0 %1209
    %v1211 = vsel %vm297, %v1197, -inf
    %1212 = vmax.xlane.f32.xlu0 %v1211
    %v1213 = vpop.xlane.xlu0 %1212
    %v1214 = vsel %vm297, %v1198, -inf
    %1215 = vmax.xlane.f32.xlu0 %v1214
    %v1216 = vpop.xlane.xlu0 %1215
    %v1217 = vsel %vm297, %v1199, -inf
    %1218 = vmax.xlane.f32.xlu0 %v1217
    %v1219 = vpop.xlane.xlu0 %1218
    %v1220 = vsel %vm297, %v1200, -inf
    %1221 = vmax.xlane.f32.xlu0 %v1220
    %v1222 = vpop.xlane.xlu0 %1221
    %v1223 = vsel %vm297, %v1201, -inf
    %1224 = vmax.xlane.f32.xlu0 %v1223
    %v1225 = vpop.xlane.xlu0 %1224
    %v1226 = vsub.f32 %v1194, %v1204
    %v1227 = vsub.f32 %v1195, %v1207
    %v1228 = vsub.f32 %v1196, %v1210
    %v1229 = vsub.f32 %v1197, %v1213
    %v1230 = vsub.f32 %v1198, %v1216
    %v1231 = vsub.f32 %v1199, %v1219
    %v1232 = vsub.f32 %v1200, %v1222
    %v1233 = vsub.f32 %v1201, %v1225
    %v1234 = vmul.f32 %v1226, 1.442695
    %v1235 = vpow.pop %v1234
    %v1236 = vmul.f32 %v1227, 1.442695
    %v1237 = vpow.pop %v1236
    %v1238 = vmul.f32 %v1228, 1.442695
    %v1239 = vpow.pop %v1238
    %v1240 = vmul.f32 %v1229, 1.442695
    %v1241 = vpow.pop %v1240
    %v1242 = vmul.f32 %v1230, 1.442695
    %v1243 = vpow.pop %v1242
    %v1244 = vmul.f32 %v1231, 1.442695
    %v1245 = vpow.pop %v1244
    %v1246 = vmul.f32 %v1232, 1.442695
    %v1247 = vpow.pop %v1246
    %v1248 = vmul.f32 %v1233, 1.442695
    %v1249 = vpow.pop %v1248
    %v1250 = vsel %vm297, %v1235, 0.0
    %1251 = vadd.xlane.f32.xlu0 %v1250
    %v1252 = vpop.xlane.xlu0 %1251
    %v1253 = vsel %vm297, %v1237, 0.0
    %1254 = vadd.xlane.f32.xlu0 %v1253
    %v1255 = vpop.xlane.xlu0 %1254
    %v1256 = vsel %vm297, %v1239, 0.0
    %1257 = vadd.xlane.f32.xlu0 %v1256
    %v1258 = vpop.xlane.xlu0 %1257
    %v1259 = vsel %vm297, %v1241, 0.0
    %1260 = vadd.xlane.f32.xlu0 %v1259
    %v1261 = vpop.xlane.xlu0 %1260
    %v1262 = vsel %vm297, %v1243, 0.0
    %1263 = vadd.xlane.f32.xlu0 %v1262
    %v1264 = vpop.xlane.xlu0 %1263
    %v1265 = vsel %vm297, %v1245, 0.0
    %1266 = vadd.xlane.f32.xlu0 %v1265
    %v1267 = vpop.xlane.xlu0 %1266
    %v1268 = vsel %vm297, %v1247, 0.0
    %1269 = vadd.xlane.f32.xlu0 %v1268
    %v1270 = vpop.xlane.xlu0 %1269
    %v1271 = vsel %vm297, %v1249, 0.0
    %1272 = vadd.xlane.f32.xlu0 %v1271
    %v1273 = vpop.xlane.xlu0 %1272
    %v1274 = vrcp.pop %v1252
    %v1275 = vrcp.pop %v1255
    %v1276 = vrcp.pop %v1258
    %v1277 = vrcp.pop %v1261
    %v1278 = vrcp.pop %v1264
    %v1279 = vrcp.pop %v1267
    %v1280 = vrcp.pop %v1270
    %v1281 = vrcp.pop %v1273
    %v1282 = vmul.f32 %v1235, %v1274
    %v1283 = vmul.f32 %v1237, %v1275
    %v1284 = vmul.f32 %v1239, %v1276
    %v1285 = vmul.f32 %v1241, %v1277
    %v1286 = vmul.f32 %v1243, %v1278
    %v1287 = vmul.f32 %v1245, %v1279
    %v1288 = vmul.f32 %v1247, %v1280
    %v1289 = vmul.f32 %v1249, %v1281
    %v1291 = vsel %vm297, %v1282, 0
    %v1294 = vsel %vm297, %v1283, 0
    %1296 = vmatpush.msra.mxu0 0.0
    %1297 = vmatpush.msra.mxu0 0.0
    %1298 = vmatpush.msra.mxu0 0.0
    %1299 = vmatpush.msra.mxu0 0.0
    %1300 = vmatpush.msra.mxu0 0.0
    %1301 = vmatpush.msra.mxu0 0.0
    %1302 = vmatpush.msra.mxu0 0.0
    %1303 = vmatpush.msra.mxu0 0.0
    %1304 = vmatpush.msra.mxu0 0.0
    %1305 = vmatpush.msra.mxu0 0.0
    %1306 = vmatpush.msra.mxu0 0.0
    %1307 = vmatpush.msra.mxu0 0.0
    %1308 = vmatpush.msra.mxu0 0.0
    %1309 = vmatpush.msra.mxu0 0.0
    %1310 = vmatpush.msra.mxu0 %v1046
    %1311 = vmatpush.msra.mxu0 %v1043
    %1312 = vmatmul.f32.gmra.mxu0 %v1291
    %v1313 = vpop.f32.mrf.mxu0
    %v1314 = vadd.f32 0.0, %v1313
    %1315 = vmatmul.f32.gmra.mxu0 %v1294
    %v1316 = vpop.f32.mrf.mxu0
    %v1317 = vadd.f32 0.0, %v1316
    %1318 = vdwg.mxu0
    %1319 = vrot.lane.b32.xlu0 %v1043, 112
    %v1320 = vpop.permute.xlu0 %1319
    %1321 = vrot.lane.b32.xlu0 %v1046, 112
    %v1322 = vpop.permute.xlu0 %1321
    %v1326 = vsel %vm297, %v1284, 0
    %v1329 = vsel %vm297, %v1285, 0
    %1331 = vmatpush.msra.mxu0 0.0
    %1332 = vmatpush.msra.mxu0 0.0
    %1333 = vmatpush.msra.mxu0 0.0
    %1334 = vmatpush.msra.mxu0 0.0
    %1335 = vmatpush.msra.mxu0 0.0
    %1336 = vmatpush.msra.mxu0 0.0
    %1337 = vmatpush.msra.mxu0 0.0
    %1338 = vmatpush.msra.mxu0 0.0
    %1339 = vmatpush.msra.mxu0 0.0
    %1340 = vmatpush.msra.mxu0 0.0
    %1341 = vmatpush.msra.mxu0 0.0
    %1342 = vmatpush.msra.mxu0 0.0
    %1343 = vmatpush.msra.mxu0 0.0
    %1344 = vmatpush.msra.mxu0 0.0
    %1345 = vmatpush.msra.mxu0 %v1322
    %1346 = vmatpush.msra.mxu0 %v1320
    %1347 = vmatmul.f32.gmra.mxu0 %v1326
    %v1348 = vpop.f32.mrf.mxu0
    %v1349 = vadd.f32 0.0, %v1348
    %1350 = vmatmul.f32.gmra.mxu0 %v1329
    %v1351 = vpop.f32.mrf.mxu0
    %v1352 = vadd.f32 0.0, %v1351
    %1353 = vdwg.mxu0
    %1354 = vrot.lane.b32.xlu0 %v1043, 96
    %v1355 = vpop.permute.xlu0 %1354
    %1356 = vrot.lane.b32.xlu0 %v1046, 96
    %v1357 = vpop.permute.xlu0 %1356
    %v1361 = vsel %vm297, %v1286, 0
    %v1364 = vsel %vm297, %v1287, 0
    %1366 = vmatpush.msra.mxu0 0.0
    %1367 = vmatpush.msra.mxu0 0.0
    %1368 = vmatpush.msra.mxu0 0.0
    %1369 = vmatpush.msra.mxu0 0.0
    %1370 = vmatpush.msra.mxu0 0.0
    %1371 = vmatpush.msra.mxu0 0.0
    %1372 = vmatpush.msra.mxu0 0.0
    %1373 = vmatpush.msra.mxu0 0.0
    %1374 = vmatpush.msra.mxu0 0.0
    %1375 = vmatpush.msra.mxu0 0.0
    %1376 = vmatpush.msra.mxu0 0.0
    %1377 = vmatpush.msra.mxu0 0.0
    %1378 = vmatpush.msra.mxu0 0.0
    %1379 = vmatpush.msra.mxu0 0.0
    %1380 = vmatpush.msra.mxu0 %v1357
    %1381 = vmatpush.msra.mxu0 %v1355
    %1382 = vmatmul.f32.gmra.mxu0 %v1361
    %v1383 = vpop.f32.mrf.mxu0
    %v1384 = vadd.f32 0.0, %v1383
    %1385 = vmatmul.f32.gmra.mxu0 %v1364
    %v1386 = vpop.f32.mrf.mxu0
    %v1387 = vadd.f32 0.0, %v1386
    %1388 = vdwg.mxu0
    %1389 = vrot.lane.b32.xlu0 %v1043, 80
    %v1390 = vpop.permute.xlu0 %1389
    %1391 = vrot.lane.b32.xlu0 %v1046, 80
    %v1392 = vpop.permute.xlu0 %1391
    %v1396 = vsel %vm297, %v1288, 0
    %v1399 = vsel %vm297, %v1289, 0
    %1401 = vmatpush.msra.mxu0 0.0
    %1402 = vmatpush.msra.mxu0 0.0
    %1403 = vmatpush.msra.mxu0 0.0
    %1404 = vmatpush.msra.mxu0 0.0
    %1405 = vmatpush.msra.mxu0 0.0
    %1406 = vmatpush.msra.mxu0 0.0
    %1407 = vmatpush.msra.mxu0 0.0
    %1408 = vmatpush.msra.mxu0 0.0
    %1409 = vmatpush.msra.mxu0 0.0
    %1410 = vmatpush.msra.mxu0 0.0
    %1411 = vmatpush.msra.mxu0 0.0
    %1412 = vmatpush.msra.mxu0 0.0
    %1413 = vmatpush.msra.mxu0 0.0
    %1414 = vmatpush.msra.mxu0 0.0
    %1415 = vmatpush.msra.mxu0 %v1392
    %1416 = vmatpush.msra.mxu0 %v1390
    %1417 = vmatmul.f32.gmra.mxu0 %v1396
    %v1418 = vpop.f32.mrf.mxu0
    %v1419 = vadd.f32 0.0, %v1418
    %1420 = vmatmul.f32.gmra.mxu0 %v1399
    %v1421 = vpop.f32.mrf.mxu0
    %v1422 = vadd.f32 0.0, %v1421
    %1423 = vdwg.mxu0
    %1426 = vrot.lane.b32.xlu0 %v1349, 16
    %v1427 = vpop.permute.xlu0 %1426
    %1428 = vrot.lane.b32.xlu0 %v1352, 16
    %v1429 = vpop.permute.xlu0 %1428
    %1434 = vrot.lane.b32.xlu0 %v1384, 32
    %v1435 = vpop.permute.xlu0 %1434
    %1436 = vrot.lane.b32.xlu0 %v1387, 32
    %v1437 = vpop.permute.xlu0 %1436
    %1442 = vrot.lane.b32.xlu0 %v1419, 48
    %v1443 = vpop.permute.xlu0 %1442
    %1444 = vrot.lane.b32.xlu0 %v1422, 48
    %v1445 = vpop.permute.xlu0 %1444
    %v1448 = vsel %vm297, %v1314, %v1427
    %v1449 = vsel %vm297, %v1317, %v1429
    %v1450 = vsel %vm546, %v1448, %v1435
    %v1451 = vsel %vm546, %v1449, %v1437
    %v1452 = vsel %vm549, %v1450, %v1443
    %v1453 = vsel %vm549, %v1451, %v1445
    %v1454 = vld [vmem:[%s16] sm:$0x1]
    %v1456 = vperm.slane %v1454, 0
    %v1458 = vadd.f32 %v1452, %v1456
    %v1459 = vadd.f32 %v1453, %v1456
    %v1460 = vmax.f32 %v1458, 0.0
    %v1461 = vmax.f32 %v1459, 0.0
    %v1462 = vld [vmem:[%s17] sm:$0xff]
    %v1463 = vld [vmem:[%s17 + $0x8] sm:$0xff]
    %v1464 = vld [vmem:[%s17 + $0x10] sm:$0xff]
    %v1465 = vld [vmem:[%s17 + $0x18] sm:$0xff]
    %v1466 = vld [vmem:[%s17 + $0x20] sm:$0xff]
    %v1467 = vld [vmem:[%s17 + $0x28] sm:$0xff]
    %v1468 = vld [vmem:[%s17 + $0x30] sm:$0xff]
    %v1469 = vld [vmem:[%s17 + $0x38] sm:$0xff]
    %v1470 = vld [vmem:[%s18] sm:$0x1]
    %v1472 = vperm.slane %v1470, 0
    %v1475 = vsel %vm132, %v1460, 0
    %v1478 = vsel %vm132, %v1461, 0
    %1480 = vmatpush.msra.mxu0 0.0
    %1481 = vmatpush.msra.mxu0 0.0
    %1482 = vmatpush.msra.mxu0 0.0
    %1483 = vmatpush.msra.mxu0 0.0
    %1484 = vmatpush.msra.mxu0 0.0
    %1485 = vmatpush.msra.mxu0 0.0
    %1486 = vmatpush.msra.mxu0 0.0
    %1487 = vmatpush.msra.mxu0 0.0
    %1488 = vmatpush.msra.mxu0 %v1469
    %1489 = vmatpush.msra.mxu0 %v1468
    %1490 = vmatpush.msra.mxu0 %v1467
    %1491 = vmatpush.msra.mxu0 %v1466
    %1492 = vmatpush.msra.mxu0 %v1465
    %1493 = vmatpush.msra.mxu0 %v1464
    %1494 = vmatpush.msra.mxu0 %v1463
    %1495 = vmatpush.msra.mxu0 %v1462
    %1496 = vmatmul.f32.gmra.mxu0 %v1475
    %v1497 = vpop.f32.mrf.mxu0
    %v1498 = vadd.f32 %v1472, %v1497
    %1499 = vmatmul.f32.gmra.mxu0 %v1478
    %v1500 = vpop.f32.mrf.mxu0
    %v1501 = vadd.f32 %v1472, %v1500
    %1502 = vdwg.mxu0
    %v1503 = vmax.f32 %v1498, 0.0
    %v1504 = vmax.f32 %v1501, 0.0
    %1507 = vrot.lane.b32.xlu0 %v1503, 4
    %v1508 = vpop.permute.xlu0 %1507
    %1509 = vrot.lane.b32.xlu0 %v1504, 4
    %v1510 = vpop.permute.xlu0 %1509
    %1513 = vrot.lane.b32.xlu0 %v1503, 8
    %v1514 = vpop.permute.xlu0 %1513
    %1515 = vrot.lane.b32.xlu0 %v1504, 8
    %v1516 = vpop.permute.xlu0 %1515
    %1519 = vrot.lane.b32.xlu0 %v1503, 12
    %v1520 = vpop.permute.xlu0 %1519
    %1521 = vrot.lane.b32.xlu0 %v1504, 12
    %v1522 = vpop.permute.xlu0 %1521
    %1525 = vrot.lane.b32.xlu0 %v1503, 16
    %v1526 = vpop.permute.xlu0 %1525
    %1527 = vrot.lane.b32.xlu0 %v1504, 16
    %v1528 = vpop.permute.xlu0 %1527
    %1531 = vrot.lane.b32.xlu0 %v1503, 20
    %v1532 = vpop.permute.xlu0 %1531
    %1533 = vrot.lane.b32.xlu0 %v1504, 20
    %v1534 = vpop.permute.xlu0 %1533
    %1537 = vrot.lane.b32.xlu0 %v1503, 24
    %v1538 = vpop.permute.xlu0 %1537
    %1539 = vrot.lane.b32.xlu0 %v1504, 24
    %v1540 = vpop.permute.xlu0 %1539
    %1543 = vrot.lane.b32.xlu0 %v1503, 28
    %v1544 = vpop.permute.xlu0 %1543
    %1545 = vrot.lane.b32.xlu0 %v1504, 28
    %v1546 = vpop.permute.xlu0 %1545
    %v1549 = vsel %vm187, %v1503, %v1508
    %v1550 = vsel %vm187, %v1504, %v1510
    %v1551 = vsel %vm86, %v1549, %v1514
    %v1552 = vsel %vm86, %v1550, %v1516
    %vm1553 = vcmask 97280
    %v1554 = vsel %vm1553, %v1551, %v1520
    %v1555 = vsel %vm1553, %v1552, %v1522
    %v1556 = vsel %vm297, %v1554, %v1526
    %v1557 = vsel %vm297, %v1555, %v1528
    %vm1558 = vcmask 162816
    %v1559 = vsel %vm1558, %v1556, %v1532
    %v1560 = vsel %vm1558, %v1557, %v1534
    %vm1561 = vcmask 195584
    %v1562 = vsel %vm1561, %v1559, %v1538
    %v1563 = vsel %vm1561, %v1560, %v1540
    %vm1564 = vcmask 228352
    %v1565 = vsel %vm1564, %v1562, %v1544
    %v1566 = vsel %vm1564, %v1563, %v1546
    %v1567 = vld [vmem:[%s20] sm:$0xff]
    %v1568 = vld [vmem:[%s20 + $0x8] sm:$0xff]
    %v1569 = vmul.f32 %v1565, %v1567
    %v1570 = vmul.f32 %v1566, %v1568
    %v1571 = vld [vmem:[%s19] sm:$0xff]
    %v1572 = vld [vmem:[%s19 + $0x8] sm:$0xff]
    %v1573 = vld [vmem:[%s19 + $0x10] sm:$0xff]
    %v1574 = vld [vmem:[%s19 + $0x18] sm:$0xff]
    %v1576 = vsel %vm546, %v1569, 0
    %v1579 = vsel %vm546, %v1570, 0
    %1581 = vmatpush.msra.mxu0 0.0
    %1582 = vmatpush.msra.mxu0 0.0
    %1583 = vmatpush.msra.mxu0 0.0
    %1584 = vmatpush.msra.mxu0 0.0
    %1585 = vmatpush.msra.mxu0 0.0
    %1586 = vmatpush.msra.mxu0 0.0
    %1587 = vmatpush.msra.mxu0 0.0
    %1588 = vmatpush.msra.mxu0 0.0
    %1589 = vmatpush.msra.mxu0 0.0
    %1590 = vmatpush.msra.mxu0 0.0
    %1591 = vmatpush.msra.mxu0 0.0
    %1592 = vmatpush.msra.mxu0 0.0
    %1593 = vmatpush.msra.mxu0 %v1574
    %1594 = vmatpush.msra.mxu0 %v1573
    %1595 = vmatpush.msra.mxu0 %v1572
    %1596 = vmatpush.msra.mxu0 %v1571
    %1597 = vmatmul.f32.gmra.mxu0 %v1576
    %v1598 = vpop.f32.mrf.mxu0
    %v1599 = vadd.f32 0.0, %v1598
    %1600 = vmatmul.f32.gmra.mxu0 %v1579
    %v1601 = vpop.f32.mrf.mxu0
    %v1602 = vadd.f32 0.0, %v1601
    %1603 = vdwg.mxu0
    %v1604 = vld [vmem:[%s21] sm:$0x3]
    %v1605 = vld [vmem:[%s22] sm:$0x1]
    %v1607 = vperm.slane %v1605, 0
    %v1610 = vsel %vm297, %v1604, 0
    %1612 = vmatpush.msra.mxu0 0.0
    %1613 = vmatpush.msra.mxu0 0.0
    %1614 = vmatpush.msra.mxu0 0.0
    %1615 = vmatpush.msra.mxu0 0.0
    %1616 = vmatpush.msra.mxu0 0.0
    %1617 = vmatpush.msra.mxu0 0.0
    %1618 = vmatpush.msra.mxu0 0.0
    %1619 = vmatpush.msra.mxu0 0.0
    %1620 = vmatpush.msra.mxu0 0.0
    %1621 = vmatpush.msra.mxu0 0.0
    %1622 = vmatpush.msra.mxu0 0.0
    %1623 = vmatpush.msra.mxu0 0.0
    %1624 = vmatpush.msra.mxu0 0.0
    %1625 = vmatpush.msra.mxu0 0.0
    %1626 = vmatpush.msra.mxu0 %v1602
    %1627 = vmatpush.msra.mxu0 %v1599
    %1628 = vmatmul.f32.gmra.mxu0 %v1610
    %v1629 = vpop.f32.mrf.mxu0
    %v1630 = vadd.f32 %v1607, %v1629
    %1631 = vdwg.mxu0
    %vm1632 = vcmask 58368
    %1633 = vst.msk [vmem:[#allocation2] sm:$0x3] %vm1632, %v1630
    // Predicated region
    $region94: #{model_forward.1} parent=1 // pred_check
      _
    $region95: #{model_forward.1} parent=1 // pred_check_branch
      %1635 = sbr.rel (0) target = $region97
    $region96: #{model_forward.1} parent=1 // pred_region
      %1637 = vsyncadd [#allocation3], 0
      %s1639 = sshll.u32 [#allocation2], 4
      %s1640 = int_to_ptr.vmem [resolvable:$true] %s1639
      %s1641 = sshll.u32 %s23, 4
      %s1642 = int_to_ptr.hbm [resolvable:$true] %s1641
      %1644 = dma.vmem_to_hbm [thread:$0]  %s1640, 32, %s1642, [#allocation3]
    $region97: #{model_forward.1} parent=1 // pred_fallthru
      _
    // Predicated region
    $region98: #{model_forward.1} parent=1 // pred_check
      _
    $region99: #{model_forward.1} parent=1 // pred_check_branch
      %1646 = sbr.rel (0) target = $region101
    $region100: #{model_forward.1} parent=1 // pred_region
      %1648 = dma.done [#allocation3], 32
    $region101: #{model_forward.1} parent=1 // pred_fallthru
      _
    %1649 = vsyncpa [#allocation3], 1

</llo_original>
